<compile_context>
chip_gen: v5e
topology: v5e:2x2
jax: 0.10.0
libtpu: 0.0.40
codegen_flags: <defaults>
</compile_context>

<pallas_src>
import math
import functools

import jax
import jax.numpy as jnp
from jax.experimental import pallas as pl
from jax.experimental.pallas import tpu as pltpu


def _embed_gather_kernel(ids_ref, table_ref, out_ref, buf_ref, sem_ref, *,
                         scale, token_tile):
    """Gather `token_tile` embedding rows from HBM, scale, store.

    ids_ref   : (n_tokens,) int32 in SMEM (scalar-prefetched token ids)
    table_ref : (V, D) embedding table left in HBM (memory_space=pl.ANY)
    out_ref   : (token_tile, D) VMEM output block
    buf_ref   : (2 * token_tile, D) VMEM double buffer for gathered rows
    sem_ref   : (2,) DMA semaphores, one per buffer half
    """
    i = pl.program_id(0)
    slot = i % 2

    def issue_tile(tile_idx, slot_idx):
        # One small DMA per row; all `token_tile` copies for this tile are in
        # flight concurrently and signal the same per-slot semaphore.
        for j in range(token_tile):
            row = ids_ref[tile_idx * token_tile + j]
            pltpu.make_async_copy(
                table_ref.at[pl.ds(row, 1), :],
                buf_ref.at[pl.ds(slot_idx * token_tile + j, 1), :],
                sem_ref.at[slot_idx],
            ).start()

    # Prime the pipeline with the first tile.
    @pl.when(i == 0)
    def _():
        issue_tile(0, 0)

    # Prefetch tile i+1 into the other buffer half so its row DMAs overlap
    # this tile's wait/scale/store and the pipelined output writeback.
    @pl.when(i + 1 < pl.num_programs(0))
    def _():
        issue_tile(i + 1, 1 - slot)

    # Wait for this tile's row DMAs (token_tile copies on this slot's sem).
    for j in range(token_tile):
        pltpu.make_async_copy(
            table_ref.at[pl.ds(0, 1), :],
            buf_ref.at[pl.ds(slot * token_tile + j, 1), :],
            sem_ref.at[slot],
        ).wait()

    # Fuse the sqrt(d_model) scale into the store. For real models d_model is
    # a multiple of 128, making this store lane-dense (unmasked vst).
    start = pl.multiple_of(slot * token_tile, token_tile)
    rows = buf_ref[pl.ds(start, token_tile), :]
    out_ref[...] = (rows * scale).astype(out_ref.dtype)


def input_embeddings(x, table, *, token_tile=128):
    """x: (B, S) int32 ids; table: (V, D) float32 -> (B, S, D) float32.

    Equivalent to nn.Embedding(V, D)(x) * sqrt(D).
    """
    b, s = x.shape
    v, d = table.shape
    n = b * s
    token_tile = min(token_tile, n)
    assert n % token_tile == 0, "number of tokens must divide the token tile"
    assert token_tile == n or token_tile % 8 == 0, \
        "token_tile must be a multiple of 8 (sublane) or cover all tokens"
    num_tiles = n // token_tile
    scale = math.sqrt(d)

    ids = x.reshape(n).astype(jnp.int32)

    kernel = functools.partial(
        _embed_gather_kernel, scale=scale, token_tile=token_tile)

    out_flat = pl.pallas_call(
        kernel,
        out_shape=jax.ShapeDtypeStruct((n, d), table.dtype),
        grid_spec=pltpu.PrefetchScalarGridSpec(
            num_scalar_prefetch=1,                 # ids -> SMEM
            grid=(num_tiles,),
            in_specs=[
                # Embedding table stays in HBM; rows are DMA-gathered manually.
                pl.BlockSpec(memory_space=pl.ANY),
            ],
            out_specs=pl.BlockSpec((token_tile, d), lambda i, ids_ref: (i, 0)),
            scratch_shapes=[
                pltpu.VMEM((2 * token_tile, d), table.dtype),  # double buffer
                pltpu.SemaphoreType.DMA((2,)),                 # one sem / half
            ],
        ),
        compiler_params=pltpu.CompilerParams(
            # "arbitrary": the DMA prefetch pipeline carries state across
            # grid steps, so the grid must not be split across TensorCores.
            dimension_semantics=("arbitrary",),
        ),
    )(ids, table)

    return out_flat.reshape(b, s, d)


if __name__ == "__main__":
    d_model = 32
    vocab_size = 64
    batch, seq = 2, 8

    key = jax.random.PRNGKey(0)
    k_tab, k_ids = jax.random.split(key)

    # nn.Embedding default init: weight ~ N(0, 1)
    table = jax.random.normal(k_tab, (vocab_size, d_model), dtype=jnp.float32)
    x = jax.random.randint(k_ids, (batch, seq), 0, vocab_size, dtype=jnp.int32)

    # token_tile=8 -> 2 grid steps, exercising both the prime and the
    # cross-step prefetch paths of the double buffer.
    out = input_embeddings(x, table, token_tile=8)
    out = jax.block_until_ready(out)

    # Reference check (plain JAX gather).
    ref = jnp.take(table, x, axis=0) * math.sqrt(d_model)
    assert out.shape == (batch, seq, d_model)
    assert jnp.allclose(out, ref, atol=1e-5, rtol=1e-5)

    print("KERNEL_OK")
</pallas_src>

<mosaic_0001>
module attributes {stable_mosaic.version = 11 : i64} {
  func.func @_embed_gather_kernel(%arg0: i32, %arg1: memref<16xi32, #tpu.memory_space<smem>>, %arg2: memref<64x32xf32, #tpu.memory_space<any>>, %arg3: memref<8x32xf32, #tpu.memory_space<vmem>>, %arg4: memref<16x32xf32, #tpu.memory_space<vmem>>, %arg5: memref<2x!tpu.dma_semaphore, #tpu.memory_space<semaphore_mem>>) attributes {dimension_semantics = [#tpu.dimension_semantics<arbitrary>], iteration_bounds = array<i64: 2>, scalar_prefetch = 1 : i64, scratch_operands = 2 : i64, tpu.core_type = #tpu.core_type<tc>, window_params = [{}, {transform_indices = @transform_1, window_bounds = array<i64: 8, 32>}]} {
    %c2_i32 = arith.constant 2 : i32
    %c0_i32 = arith.constant 0 : i32
    %0 = arith.cmpi eq, %c2_i32, %c0_i32 : i32
    %c1_i32 = arith.constant 1 : i32
    %1 = arith.select %0, %c1_i32, %c2_i32 : i32
    %2 = arith.remsi %arg0, %1 : i32
    %c0_i32_0 = arith.constant 0 : i32
    %3 = arith.cmpi ne, %2, %c0_i32_0 : i32
    %c0_i32_1 = arith.constant 0 : i32
    %4 = arith.cmpi slt, %2, %c0_i32_1 : i32
    %c0_i32_2 = arith.constant 0 : i32
    %5 = arith.cmpi slt, %1, %c0_i32_2 : i32
    %6 = arith.xori %4, %5 : i1
    %7 = arith.andi %6, %3 : i1
    %8 = arith.addi %2, %1 : i32
    %9 = arith.select %7, %8, %2 : i32
    %c0_i32_3 = arith.constant 0 : i32
    %10 = arith.cmpi eq, %arg0, %c0_i32_3 : i32
    %11 = arith.extui %10 : i1 to i32
    %c0_i32_4 = arith.constant 0 : i32
    %12 = arith.cmpi ne, %11, %c0_i32_4 : i32
    scf.if %12 {
      %c0_45 = arith.constant 0 : index
      %72 = memref.load %arg1[%c0_45] : memref<16xi32, #tpu.memory_space<smem>>
      %c0_i32_46 = arith.constant 0 : i32
      %c0_i32_47 = arith.constant 0 : i32
      %73 = tpu.memref_slice %arg2[%72, %c0_i32_47] : memref<64x32xf32, #tpu.memory_space<any>> -> memref<1x32xf32, #tpu.memory_space<any>>
      %c0_i32_48 = arith.constant 0 : i32
      %c0_i32_49 = arith.constant 0 : i32
      %74 = tpu.memref_slice %arg4[%c0_i32_48, %c0_i32_49] : memref<16x32xf32, #tpu.memory_space<vmem>> -> memref<1x32xf32, #tpu.memory_space<vmem>>
      %75 = tpu.memref_slice %arg5[%c0_i32_46] : memref<2x!tpu.dma_semaphore, #tpu.memory_space<semaphore_mem>> -> memref<1x!tpu.dma_semaphore, #tpu.memory_space<semaphore_mem>>
      %76 = tpu.memref_squeeze %75 : memref<1x!tpu.dma_semaphore, #tpu.memory_space<semaphore_mem>> -> memref<!tpu.dma_semaphore, #tpu.memory_space<semaphore_mem>>
      tpu.enqueue_dma source(%73 : memref<1x32xf32, #tpu.memory_space<any>>) target(%74 : memref<1x32xf32, #tpu.memory_space<vmem>>) target_semaphore(%76 : memref<!tpu.dma_semaphore, #tpu.memory_space<semaphore_mem>>)
      %c1 = arith.constant 1 : index
      %77 = memref.load %arg1[%c1] : memref<16xi32, #tpu.memory_space<smem>>
      %c0_i32_50 = arith.constant 0 : i32
      %c0_i32_51 = arith.constant 0 : i32
      %78 = tpu.memref_slice %arg2[%77, %c0_i32_51] : memref<64x32xf32, #tpu.memory_space<any>> -> memref<1x32xf32, #tpu.memory_space<any>>
      %c1_i32_52 = arith.constant 1 : i32
      %c0_i32_53 = arith.constant 0 : i32
      %79 = tpu.memref_slice %arg4[%c1_i32_52, %c0_i32_53] : memref<16x32xf32, #tpu.memory_space<vmem>> -> memref<1x32xf32, #tpu.memory_space<vmem>>
      %80 = tpu.memref_slice %arg5[%c0_i32_50] : memref<2x!tpu.dma_semaphore, #tpu.memory_space<semaphore_mem>> -> memref<1x!tpu.dma_semaphore, #tpu.memory_space<semaphore_mem>>
      %81 = tpu.memref_squeeze %80 : memref<1x!tpu.dma_semaphore, #tpu.memory_space<semaphore_mem>> -> memref<!tpu.dma_semaphore, #tpu.memory_space<semaphore_mem>>
      tpu.enqueue_dma source(%78 : memref<1x32xf32, #tpu.memory_space<any>>) target(%79 : memref<1x32xf32, #tpu.memory_space<vmem>>) target_semaphore(%81 : memref<!tpu.dma_semaphore, #tpu.memory_space<semaphore_mem>>)
      %c2 = arith.constant 2 : index
      %82 = memref.load %arg1[%c2] : memref<16xi32, #tpu.memory_space<smem>>
      %c0_i32_54 = arith.constant 0 : i32
      %c0_i32_55 = arith.constant 0 : i32
      %83 = tpu.memref_slice %arg2[%82, %c0_i32_55] : memref<64x32xf32, #tpu.memory_space<any>> -> memref<1x32xf32, #tpu.memory_space<any>>
      %c2_i32_56 = arith.constant 2 : i32
      %c0_i32_57 = arith.constant 0 : i32
      %84 = tpu.memref_slice %arg4[%c2_i32_56, %c0_i32_57] : memref<16x32xf32, #tpu.memory_space<vmem>> -> memref<1x32xf32, #tpu.memory_space<vmem>>
      %85 = tpu.memref_slice %arg5[%c0_i32_54] : memref<2x!tpu.dma_semaphore, #tpu.memory_space<semaphore_mem>> -> memref<1x!tpu.dma_semaphore, #tpu.memory_space<semaphore_mem>>
      %86 = tpu.memref_squeeze %85 : memref<1x!tpu.dma_semaphore, #tpu.memory_space<semaphore_mem>> -> memref<!tpu.dma_semaphore, #tpu.memory_space<semaphore_mem>>
      tpu.enqueue_dma source(%83 : memref<1x32xf32, #tpu.memory_space<any>>) target(%84 : memref<1x32xf32, #tpu.memory_space<vmem>>) target_semaphore(%86 : memref<!tpu.dma_semaphore, #tpu.memory_space<semaphore_mem>>)
      %c3 = arith.constant 3 : index
      %87 = memref.load %arg1[%c3] : memref<16xi32, #tpu.memory_space<smem>>
      %c0_i32_58 = arith.constant 0 : i32
      %c0_i32_59 = arith.constant 0 : i32
      %88 = tpu.memref_slice %arg2[%87, %c0_i32_59] : memref<64x32xf32, #tpu.memory_space<any>> -> memref<1x32xf32, #tpu.memory_space<any>>
      %c3_i32_60 = arith.constant 3 : i32
      %c0_i32_61 = arith.constant 0 : i32
      %89 = tpu.memref_slice %arg4[%c3_i32_60, %c0_i32_61] : memref<16x32xf32, #tpu.memory_space<vmem>> -> memref<1x32xf32, #tpu.memory_space<vmem>>
      %90 = tpu.memref_slice %arg5[%c0_i32_58] : memref<2x!tpu.dma_semaphore, #tpu.memory_space<semaphore_mem>> -> memref<1x!tpu.dma_semaphore, #tpu.memory_space<semaphore_mem>>
      %91 = tpu.memref_squeeze %90 : memref<1x!tpu.dma_semaphore, #tpu.memory_space<semaphore_mem>> -> memref<!tpu.dma_semaphore, #tpu.memory_space<semaphore_mem>>
      tpu.enqueue_dma source(%88 : memref<1x32xf32, #tpu.memory_space<any>>) target(%89 : memref<1x32xf32, #tpu.memory_space<vmem>>) target_semaphore(%91 : memref<!tpu.dma_semaphore, #tpu.memory_space<semaphore_mem>>)
      %c4 = arith.constant 4 : index
      %92 = memref.load %arg1[%c4] : memref<16xi32, #tpu.memory_space<smem>>
      %c0_i32_62 = arith.constant 0 : i32
      %c0_i32_63 = arith.constant 0 : i32
      %93 = tpu.memref_slice %arg2[%92, %c0_i32_63] : memref<64x32xf32, #tpu.memory_space<any>> -> memref<1x32xf32, #tpu.memory_space<any>>
      %c4_i32_64 = arith.constant 4 : i32
      %c0_i32_65 = arith.constant 0 : i32
      %94 = tpu.memref_slice %arg4[%c4_i32_64, %c0_i32_65] : memref<16x32xf32, #tpu.memory_space<vmem>> -> memref<1x32xf32, #tpu.memory_space<vmem>>
      %95 = tpu.memref_slice %arg5[%c0_i32_62] : memref<2x!tpu.dma_semaphore, #tpu.memory_space<semaphore_mem>> -> memref<1x!tpu.dma_semaphore, #tpu.memory_space<semaphore_mem>>
      %96 = tpu.memref_squeeze %95 : memref<1x!tpu.dma_semaphore, #tpu.memory_space<semaphore_mem>> -> memref<!tpu.dma_semaphore, #tpu.memory_space<semaphore_mem>>
      tpu.enqueue_dma source(%93 : memref<1x32xf32, #tpu.memory_space<any>>) target(%94 : memref<1x32xf32, #tpu.memory_space<vmem>>) target_semaphore(%96 : memref<!tpu.dma_semaphore, #tpu.memory_space<semaphore_mem>>)
      %c5 = arith.constant 5 : index
      %97 = memref.load %arg1[%c5] : memref<16xi32, #tpu.memory_space<smem>>
      %c0_i32_66 = arith.constant 0 : i32
      %c0_i32_67 = arith.constant 0 : i32
      %98 = tpu.memref_slice %arg2[%97, %c0_i32_67] : memref<64x32xf32, #tpu.memory_space<any>> -> memref<1x32xf32, #tpu.memory_space<any>>
      %c5_i32_68 = arith.constant 5 : i32
      %c0_i32_69 = arith.constant 0 : i32
      %99 = tpu.memref_slice %arg4[%c5_i32_68, %c0_i32_69] : memref<16x32xf32, #tpu.memory_space<vmem>> -> memref<1x32xf32, #tpu.memory_space<vmem>>
      %100 = tpu.memref_slice %arg5[%c0_i32_66] : memref<2x!tpu.dma_semaphore, #tpu.memory_space<semaphore_mem>> -> memref<1x!tpu.dma_semaphore, #tpu.memory_space<semaphore_mem>>
      %101 = tpu.memref_squeeze %100 : memref<1x!tpu.dma_semaphore, #tpu.memory_space<semaphore_mem>> -> memref<!tpu.dma_semaphore, #tpu.memory_space<semaphore_mem>>
      tpu.enqueue_dma source(%98 : memref<1x32xf32, #tpu.memory_space<any>>) target(%99 : memref<1x32xf32, #tpu.memory_space<vmem>>) target_semaphore(%101 : memref<!tpu.dma_semaphore, #tpu.memory_space<semaphore_mem>>)
      %c6 = arith.constant 6 : index
      %102 = memref.load %arg1[%c6] : memref<16xi32, #tpu.memory_space<smem>>
      %c0_i32_70 = arith.constant 0 : i32
      %c0_i32_71 = arith.constant 0 : i32
      %103 = tpu.memref_slice %arg2[%102, %c0_i32_71] : memref<64x32xf32, #tpu.memory_space<any>> -> memref<1x32xf32, #tpu.memory_space<any>>
      %c6_i32_72 = arith.constant 6 : i32
      %c0_i32_73 = arith.constant 0 : i32
      %104 = tpu.memref_slice %arg4[%c6_i32_72, %c0_i32_73] : memref<16x32xf32, #tpu.memory_space<vmem>> -> memref<1x32xf32, #tpu.memory_space<vmem>>
      %105 = tpu.memref_slice %arg5[%c0_i32_70] : memref<2x!tpu.dma_semaphore, #tpu.memory_space<semaphore_mem>> -> memref<1x!tpu.dma_semaphore, #tpu.memory_space<semaphore_mem>>
      %106 = tpu.memref_squeeze %105 : memref<1x!tpu.dma_semaphore, #tpu.memory_space<semaphore_mem>> -> memref<!tpu.dma_semaphore, #tpu.memory_space<semaphore_mem>>
      tpu.enqueue_dma source(%103 : memref<1x32xf32, #tpu.memory_space<any>>) target(%104 : memref<1x32xf32, #tpu.memory_space<vmem>>) target_semaphore(%106 : memref<!tpu.dma_semaphore, #tpu.memory_space<semaphore_mem>>)
      %c7 = arith.constant 7 : index
      %107 = memref.load %arg1[%c7] : memref<16xi32, #tpu.memory_space<smem>>
      %c0_i32_74 = arith.constant 0 : i32
      %c0_i32_75 = arith.constant 0 : i32
      %108 = tpu.memref_slice %arg2[%107, %c0_i32_75] : memref<64x32xf32, #tpu.memory_space<any>> -> memref<1x32xf32, #tpu.memory_space<any>>
      %c7_i32_76 = arith.constant 7 : i32
      %c0_i32_77 = arith.constant 0 : i32
      %109 = tpu.memref_slice %arg4[%c7_i32_76, %c0_i32_77] : memref<16x32xf32, #tpu.memory_space<vmem>> -> memref<1x32xf32, #tpu.memory_space<vmem>>
      %110 = tpu.memref_slice %arg5[%c0_i32_74] : memref<2x!tpu.dma_semaphore, #tpu.memory_space<semaphore_mem>> -> memref<1x!tpu.dma_semaphore, #tpu.memory_space<semaphore_mem>>
      %111 = tpu.memref_squeeze %110 : memref<1x!tpu.dma_semaphore, #tpu.memory_space<semaphore_mem>> -> memref<!tpu.dma_semaphore, #tpu.memory_space<semaphore_mem>>
      tpu.enqueue_dma source(%108 : memref<1x32xf32, #tpu.memory_space<any>>) target(%109 : memref<1x32xf32, #tpu.memory_space<vmem>>) target_semaphore(%111 : memref<!tpu.dma_semaphore, #tpu.memory_space<semaphore_mem>>)
    } else {
    }
    %c1_i32_5 = arith.constant 1 : i32
    %13 = arith.addi %arg0, %c1_i32_5 : i32
    %c2_i32_6 = arith.constant 2 : i32
    %14 = arith.cmpi slt, %13, %c2_i32_6 : i32
    %15 = arith.extui %14 : i1 to i32
    %c0_i32_7 = arith.constant 0 : i32
    %16 = arith.cmpi ne, %15, %c0_i32_7 : i32
    scf.if %16 {
      %c1_i32_45 = arith.constant 1 : i32
      %72 = arith.addi %arg0, %c1_i32_45 : i32
      %c1_i32_46 = arith.constant 1 : i32
      %73 = arith.subi %c1_i32_46, %9 : i32
      %c8_i32_47 = arith.constant 8 : i32
      %74 = arith.muli %72, %c8_i32_47 : i32
      %c0_i32_48 = arith.constant 0 : i32
      %75 = arith.addi %74, %c0_i32_48 : i32
      %76 = arith.index_cast %75 : i32 to index
      %77 = memref.load %arg1[%76] : memref<16xi32, #tpu.memory_space<smem>>
      %c8_i32_49 = arith.constant 8 : i32
      %78 = arith.muli %73, %c8_i32_49 : i32
      %c0_i32_50 = arith.constant 0 : i32
      %79 = arith.addi %78, %c0_i32_50 : i32
      %c0_i32_51 = arith.constant 0 : i32
      %80 = tpu.memref_slice %arg2[%77, %c0_i32_51] : memref<64x32xf32, #tpu.memory_space<any>> -> memref<1x32xf32, #tpu.memory_space<any>>
      %c0_i32_52 = arith.constant 0 : i32
      %81 = tpu.memref_slice %arg4[%79, %c0_i32_52] : memref<16x32xf32, #tpu.memory_space<vmem>> -> memref<1x32xf32, #tpu.memory_space<vmem>>
      %82 = tpu.memref_slice %arg5[%73] : memref<2x!tpu.dma_semaphore, #tpu.memory_space<semaphore_mem>> -> memref<1x!tpu.dma_semaphore, #tpu.memory_space<semaphore_mem>>
      %83 = tpu.memref_squeeze %82 : memref<1x!tpu.dma_semaphore, #tpu.memory_space<semaphore_mem>> -> memref<!tpu.dma_semaphore, #tpu.memory_space<semaphore_mem>>
      tpu.enqueue_dma source(%80 : memref<1x32xf32, #tpu.memory_space<any>>) target(%81 : memref<1x32xf32, #tpu.memory_space<vmem>>) target_semaphore(%83 : memref<!tpu.dma_semaphore, #tpu.memory_space<semaphore_mem>>)
      %c8_i32_53 = arith.constant 8 : i32
      %84 = arith.muli %72, %c8_i32_53 : i32
      %c1_i32_54 = arith.constant 1 : i32
      %85 = arith.addi %84, %c1_i32_54 : i32
      %86 = arith.index_cast %85 : i32 to index
      %87 = memref.load %arg1[%86] : memref<16xi32, #tpu.memory_space<smem>>
      %c8_i32_55 = arith.constant 8 : i32
      %88 = arith.muli %73, %c8_i32_55 : i32
      %c1_i32_56 = arith.constant 1 : i32
      %89 = arith.addi %88, %c1_i32_56 : i32
      %c0_i32_57 = arith.constant 0 : i32
      %90 = tpu.memref_slice %arg2[%87, %c0_i32_57] : memref<64x32xf32, #tpu.memory_space<any>> -> memref<1x32xf32, #tpu.memory_space<any>>
      %c0_i32_58 = arith.constant 0 : i32
      %91 = tpu.memref_slice %arg4[%89, %c0_i32_58] : memref<16x32xf32, #tpu.memory_space<vmem>> -> memref<1x32xf32, #tpu.memory_space<vmem>>
      %92 = tpu.memref_slice %arg5[%73] : memref<2x!tpu.dma_semaphore, #tpu.memory_space<semaphore_mem>> -> memref<1x!tpu.dma_semaphore, #tpu.memory_space<semaphore_mem>>
      %93 = tpu.memref_squeeze %92 : memref<1x!tpu.dma_semaphore, #tpu.memory_space<semaphore_mem>> -> memref<!tpu.dma_semaphore, #tpu.memory_space<semaphore_mem>>
      tpu.enqueue_dma source(%90 : memref<1x32xf32, #tpu.memory_space<any>>) target(%91 : memref<1x32xf32, #tpu.memory_space<vmem>>) target_semaphore(%93 : memref<!tpu.dma_semaphore, #tpu.memory_space<semaphore_mem>>)
      %c8_i32_59 = arith.constant 8 : i32
      %94 = arith.muli %72, %c8_i32_59 : i32
      %c2_i32_60 = arith.constant 2 : i32
      %95 = arith.addi %94, %c2_i32_60 : i32
      %96 = arith.index_cast %95 : i32 to index
      %97 = memref.load %arg1[%96] : memref<16xi32, #tpu.memory_space<smem>>
      %c8_i32_61 = arith.constant 8 : i32
      %98 = arith.muli %73, %c8_i32_61 : i32
      %c2_i32_62 = arith.constant 2 : i32
      %99 = arith.addi %98, %c2_i32_62 : i32
      %c0_i32_63 = arith.constant 0 : i32
      %100 = tpu.memref_slice %arg2[%97, %c0_i32_63] : memref<64x32xf32, #tpu.memory_space<any>> -> memref<1x32xf32, #tpu.memory_space<any>>
      %c0_i32_64 = arith.constant 0 : i32
      %101 = tpu.memref_slice %arg4[%99, %c0_i32_64] : memref<16x32xf32, #tpu.memory_space<vmem>> -> memref<1x32xf32, #tpu.memory_space<vmem>>
      %102 = tpu.memref_slice %arg5[%73] : memref<2x!tpu.dma_semaphore, #tpu.memory_space<semaphore_mem>> -> memref<1x!tpu.dma_semaphore, #tpu.memory_space<semaphore_mem>>
      %103 = tpu.memref_squeeze %102 : memref<1x!tpu.dma_semaphore, #tpu.memory_space<semaphore_mem>> -> memref<!tpu.dma_semaphore, #tpu.memory_space<semaphore_mem>>
      tpu.enqueue_dma source(%100 : memref<1x32xf32, #tpu.memory_space<any>>) target(%101 : memref<1x32xf32, #tpu.memory_space<vmem>>) target_semaphore(%103 : memref<!tpu.dma_semaphore, #tpu.memory_space<semaphore_mem>>)
      %c8_i32_65 = arith.constant 8 : i32
      %104 = arith.muli %72, %c8_i32_65 : i32
      %c3_i32_66 = arith.constant 3 : i32
      %105 = arith.addi %104, %c3_i32_66 : i32
      %106 = arith.index_cast %105 : i32 to index
      %107 = memref.load %arg1[%106] : memref<16xi32, #tpu.memory_space<smem>>
      %c8_i32_67 = arith.constant 8 : i32
      %108 = arith.muli %73, %c8_i32_67 : i32
      %c3_i32_68 = arith.constant 3 : i32
      %109 = arith.addi %108, %c3_i32_68 : i32
      %c0_i32_69 = arith.constant 0 : i32
      %110 = tpu.memref_slice %arg2[%107, %c0_i32_69] : memref<64x32xf32, #tpu.memory_space<any>> -> memref<1x32xf32, #tpu.memory_space<any>>
      %c0_i32_70 = arith.constant 0 : i32
      %111 = tpu.memref_slice %arg4[%109, %c0_i32_70] : memref<16x32xf32, #tpu.memory_space<vmem>> -> memref<1x32xf32, #tpu.memory_space<vmem>>
      %112 = tpu.memref_slice %arg5[%73] : memref<2x!tpu.dma_semaphore, #tpu.memory_space<semaphore_mem>> -> memref<1x!tpu.dma_semaphore, #tpu.memory_space<semaphore_mem>>
      %113 = tpu.memref_squeeze %112 : memref<1x!tpu.dma_semaphore, #tpu.memory_space<semaphore_mem>> -> memref<!tpu.dma_semaphore, #tpu.memory_space<semaphore_mem>>
      tpu.enqueue_dma source(%110 : memref<1x32xf32, #tpu.memory_space<any>>) target(%111 : memref<1x32xf32, #tpu.memory_space<vmem>>) target_semaphore(%113 : memref<!tpu.dma_semaphore, #tpu.memory_space<semaphore_mem>>)
      %c8_i32_71 = arith.constant 8 : i32
      %114 = arith.muli %72, %c8_i32_71 : i32
      %c4_i32_72 = arith.constant 4 : i32
      %115 = arith.addi %114, %c4_i32_72 : i32
      %116 = arith.index_cast %115 : i32 to index
      %117 = memref.load %arg1[%116] : memref<16xi32, #tpu.memory_space<smem>>
      %c8_i32_73 = arith.constant 8 : i32
      %118 = arith.muli %73, %c8_i32_73 : i32
      %c4_i32_74 = arith.constant 4 : i32
      %119 = arith.addi %118, %c4_i32_74 : i32
      %c0_i32_75 = arith.constant 0 : i32
      %120 = tpu.memref_slice %arg2[%117, %c0_i32_75] : memref<64x32xf32, #tpu.memory_space<any>> -> memref<1x32xf32, #tpu.memory_space<any>>
      %c0_i32_76 = arith.constant 0 : i32
      %121 = tpu.memref_slice %arg4[%119, %c0_i32_76] : memref<16x32xf32, #tpu.memory_space<vmem>> -> memref<1x32xf32, #tpu.memory_space<vmem>>
      %122 = tpu.memref_slice %arg5[%73] : memref<2x!tpu.dma_semaphore, #tpu.memory_space<semaphore_mem>> -> memref<1x!tpu.dma_semaphore, #tpu.memory_space<semaphore_mem>>
      %123 = tpu.memref_squeeze %122 : memref<1x!tpu.dma_semaphore, #tpu.memory_space<semaphore_mem>> -> memref<!tpu.dma_semaphore, #tpu.memory_space<semaphore_mem>>
      tpu.enqueue_dma source(%120 : memref<1x32xf32, #tpu.memory_space<any>>) target(%121 : memref<1x32xf32, #tpu.memory_space<vmem>>) target_semaphore(%123 : memref<!tpu.dma_semaphore, #tpu.memory_space<semaphore_mem>>)
      %c8_i32_77 = arith.constant 8 : i32
      %124 = arith.muli %72, %c8_i32_77 : i32
      %c5_i32_78 = arith.constant 5 : i32
      %125 = arith.addi %124, %c5_i32_78 : i32
      %126 = arith.index_cast %125 : i32 to index
      %127 = memref.load %arg1[%126] : memref<16xi32, #tpu.memory_space<smem>>
      %c8_i32_79 = arith.constant 8 : i32
      %128 = arith.muli %73, %c8_i32_79 : i32
      %c5_i32_80 = arith.constant 5 : i32
      %129 = arith.addi %128, %c5_i32_80 : i32
      %c0_i32_81 = arith.constant 0 : i32
      %130 = tpu.memref_slice %arg2[%127, %c0_i32_81] : memref<64x32xf32, #tpu.memory_space<any>> -> memref<1x32xf32, #tpu.memory_space<any>>
      %c0_i32_82 = arith.constant 0 : i32
      %131 = tpu.memref_slice %arg4[%129, %c0_i32_82] : memref<16x32xf32, #tpu.memory_space<vmem>> -> memref<1x32xf32, #tpu.memory_space<vmem>>
      %132 = tpu.memref_slice %arg5[%73] : memref<2x!tpu.dma_semaphore, #tpu.memory_space<semaphore_mem>> -> memref<1x!tpu.dma_semaphore, #tpu.memory_space<semaphore_mem>>
      %133 = tpu.memref_squeeze %132 : memref<1x!tpu.dma_semaphore, #tpu.memory_space<semaphore_mem>> -> memref<!tpu.dma_semaphore, #tpu.memory_space<semaphore_mem>>
      tpu.enqueue_dma source(%130 : memref<1x32xf32, #tpu.memory_space<any>>) target(%131 : memref<1x32xf32, #tpu.memory_space<vmem>>) target_semaphore(%133 : memref<!tpu.dma_semaphore, #tpu.memory_space<semaphore_mem>>)
      %c8_i32_83 = arith.constant 8 : i32
      %134 = arith.muli %72, %c8_i32_83 : i32
      %c6_i32_84 = arith.constant 6 : i32
      %135 = arith.addi %134, %c6_i32_84 : i32
      %136 = arith.index_cast %135 : i32 to index
      %137 = memref.load %arg1[%136] : memref<16xi32, #tpu.memory_space<smem>>
      %c8_i32_85 = arith.constant 8 : i32
      %138 = arith.muli %73, %c8_i32_85 : i32
      %c6_i32_86 = arith.constant 6 : i32
      %139 = arith.addi %138, %c6_i32_86 : i32
      %c0_i32_87 = arith.constant 0 : i32
      %140 = tpu.memref_slice %arg2[%137, %c0_i32_87] : memref<64x32xf32, #tpu.memory_space<any>> -> memref<1x32xf32, #tpu.memory_space<any>>
      %c0_i32_88 = arith.constant 0 : i32
      %141 = tpu.memref_slice %arg4[%139, %c0_i32_88] : memref<16x32xf32, #tpu.memory_space<vmem>> -> memref<1x32xf32, #tpu.memory_space<vmem>>
      %142 = tpu.memref_slice %arg5[%73] : memref<2x!tpu.dma_semaphore, #tpu.memory_space<semaphore_mem>> -> memref<1x!tpu.dma_semaphore, #tpu.memory_space<semaphore_mem>>
      %143 = tpu.memref_squeeze %142 : memref<1x!tpu.dma_semaphore, #tpu.memory_space<semaphore_mem>> -> memref<!tpu.dma_semaphore, #tpu.memory_space<semaphore_mem>>
      tpu.enqueue_dma source(%140 : memref<1x32xf32, #tpu.memory_space<any>>) target(%141 : memref<1x32xf32, #tpu.memory_space<vmem>>) target_semaphore(%143 : memref<!tpu.dma_semaphore, #tpu.memory_space<semaphore_mem>>)
      %c8_i32_89 = arith.constant 8 : i32
      %144 = arith.muli %72, %c8_i32_89 : i32
      %c7_i32_90 = arith.constant 7 : i32
      %145 = arith.addi %144, %c7_i32_90 : i32
      %146 = arith.index_cast %145 : i32 to index
      %147 = memref.load %arg1[%146] : memref<16xi32, #tpu.memory_space<smem>>
      %c8_i32_91 = arith.constant 8 : i32
      %148 = arith.muli %73, %c8_i32_91 : i32
      %c7_i32_92 = arith.constant 7 : i32
      %149 = arith.addi %148, %c7_i32_92 : i32
      %c0_i32_93 = arith.constant 0 : i32
      %150 = tpu.memref_slice %arg2[%147, %c0_i32_93] : memref<64x32xf32, #tpu.memory_space<any>> -> memref<1x32xf32, #tpu.memory_space<any>>
      %c0_i32_94 = arith.constant 0 : i32
      %151 = tpu.memref_slice %arg4[%149, %c0_i32_94] : memref<16x32xf32, #tpu.memory_space<vmem>> -> memref<1x32xf32, #tpu.memory_space<vmem>>
      %152 = tpu.memref_slice %arg5[%73] : memref<2x!tpu.dma_semaphore, #tpu.memory_space<semaphore_mem>> -> memref<1x!tpu.dma_semaphore, #tpu.memory_space<semaphore_mem>>
      %153 = tpu.memref_squeeze %152 : memref<1x!tpu.dma_semaphore, #tpu.memory_space<semaphore_mem>> -> memref<!tpu.dma_semaphore, #tpu.memory_space<semaphore_mem>>
      tpu.enqueue_dma source(%150 : memref<1x32xf32, #tpu.memory_space<any>>) target(%151 : memref<1x32xf32, #tpu.memory_space<vmem>>) target_semaphore(%153 : memref<!tpu.dma_semaphore, #tpu.memory_space<semaphore_mem>>)
    } else {
    }
    %c8_i32 = arith.constant 8 : i32
    %17 = arith.muli %9, %c8_i32 : i32
    %c0_i32_8 = arith.constant 0 : i32
    %18 = arith.addi %17, %c0_i32_8 : i32
    %c0_i32_9 = arith.constant 0 : i32
    %c0_i32_10 = arith.constant 0 : i32
    %19 = tpu.memref_slice %arg2[%c0_i32_9, %c0_i32_10] : memref<64x32xf32, #tpu.memory_space<any>> -> memref<1x32xf32, #tpu.memory_space<any>>
    %c0_i32_11 = arith.constant 0 : i32
    %20 = tpu.memref_slice %arg4[%18, %c0_i32_11] : memref<16x32xf32, #tpu.memory_space<vmem>> -> memref<1x32xf32, #tpu.memory_space<vmem>>
    %21 = tpu.memref_slice %arg5[%9] : memref<2x!tpu.dma_semaphore, #tpu.memory_space<semaphore_mem>> -> memref<1x!tpu.dma_semaphore, #tpu.memory_space<semaphore_mem>>
    %22 = tpu.memref_squeeze %21 : memref<1x!tpu.dma_semaphore, #tpu.memory_space<semaphore_mem>> -> memref<!tpu.dma_semaphore, #tpu.memory_space<semaphore_mem>>
    tpu.wait_dma2 semaphore(%22 : memref<!tpu.dma_semaphore, #tpu.memory_space<semaphore_mem>>) src(%19 : memref<1x32xf32, #tpu.memory_space<any>>) dst(%20 : memref<1x32xf32, #tpu.memory_space<vmem>>)
    %c8_i32_12 = arith.constant 8 : i32
    %23 = arith.muli %9, %c8_i32_12 : i32
    %c1_i32_13 = arith.constant 1 : i32
    %24 = arith.addi %23, %c1_i32_13 : i32
    %c0_i32_14 = arith.constant 0 : i32
    %c0_i32_15 = arith.constant 0 : i32
    %25 = tpu.memref_slice %arg2[%c0_i32_14, %c0_i32_15] : memref<64x32xf32, #tpu.memory_space<any>> -> memref<1x32xf32, #tpu.memory_space<any>>
    %c0_i32_16 = arith.constant 0 : i32
    %26 = tpu.memref_slice %arg4[%24, %c0_i32_16] : memref<16x32xf32, #tpu.memory_space<vmem>> -> memref<1x32xf32, #tpu.memory_space<vmem>>
    %27 = tpu.memref_slice %arg5[%9] : memref<2x!tpu.dma_semaphore, #tpu.memory_space<semaphore_mem>> -> memref<1x!tpu.dma_semaphore, #tpu.memory_space<semaphore_mem>>
    %28 = tpu.memref_squeeze %27 : memref<1x!tpu.dma_semaphore, #tpu.memory_space<semaphore_mem>> -> memref<!tpu.dma_semaphore, #tpu.memory_space<semaphore_mem>>
    tpu.wait_dma2 semaphore(%28 : memref<!tpu.dma_semaphore, #tpu.memory_space<semaphore_mem>>) src(%25 : memref<1x32xf32, #tpu.memory_space<any>>) dst(%26 : memref<1x32xf32, #tpu.memory_space<vmem>>)
    %c8_i32_17 = arith.constant 8 : i32
    %29 = arith.muli %9, %c8_i32_17 : i32
    %c2_i32_18 = arith.constant 2 : i32
    %30 = arith.addi %29, %c2_i32_18 : i32
    %c0_i32_19 = arith.constant 0 : i32
    %c0_i32_20 = arith.constant 0 : i32
    %31 = tpu.memref_slice %arg2[%c0_i32_19, %c0_i32_20] : memref<64x32xf32, #tpu.memory_space<any>> -> memref<1x32xf32, #tpu.memory_space<any>>
    %c0_i32_21 = arith.constant 0 : i32
    %32 = tpu.memref_slice %arg4[%30, %c0_i32_21] : memref<16x32xf32, #tpu.memory_space<vmem>> -> memref<1x32xf32, #tpu.memory_space<vmem>>
    %33 = tpu.memref_slice %arg5[%9] : memref<2x!tpu.dma_semaphore, #tpu.memory_space<semaphore_mem>> -> memref<1x!tpu.dma_semaphore, #tpu.memory_space<semaphore_mem>>
    %34 = tpu.memref_squeeze %33 : memref<1x!tpu.dma_semaphore, #tpu.memory_space<semaphore_mem>> -> memref<!tpu.dma_semaphore, #tpu.memory_space<semaphore_mem>>
    tpu.wait_dma2 semaphore(%34 : memref<!tpu.dma_semaphore, #tpu.memory_space<semaphore_mem>>) src(%31 : memref<1x32xf32, #tpu.memory_space<any>>) dst(%32 : memref<1x32xf32, #tpu.memory_space<vmem>>)
    %c8_i32_22 = arith.constant 8 : i32
    %35 = arith.muli %9, %c8_i32_22 : i32
    %c3_i32 = arith.constant 3 : i32
    %36 = arith.addi %35, %c3_i32 : i32
    %c0_i32_23 = arith.constant 0 : i32
    %c0_i32_24 = arith.constant 0 : i32
    %37 = tpu.memref_slice %arg2[%c0_i32_23, %c0_i32_24] : memref<64x32xf32, #tpu.memory_space<any>> -> memref<1x32xf32, #tpu.memory_space<any>>
    %c0_i32_25 = arith.constant 0 : i32
    %38 = tpu.memref_slice %arg4[%36, %c0_i32_25] : memref<16x32xf32, #tpu.memory_space<vmem>> -> memref<1x32xf32, #tpu.memory_space<vmem>>
    %39 = tpu.memref_slice %arg5[%9] : memref<2x!tpu.dma_semaphore, #tpu.memory_space<semaphore_mem>> -> memref<1x!tpu.dma_semaphore, #tpu.memory_space<semaphore_mem>>
    %40 = tpu.memref_squeeze %39 : memref<1x!tpu.dma_semaphore, #tpu.memory_space<semaphore_mem>> -> memref<!tpu.dma_semaphore, #tpu.memory_space<semaphore_mem>>
    tpu.wait_dma2 semaphore(%40 : memref<!tpu.dma_semaphore, #tpu.memory_space<semaphore_mem>>) src(%37 : memref<1x32xf32, #tpu.memory_space<any>>) dst(%38 : memref<1x32xf32, #tpu.memory_space<vmem>>)
    %c8_i32_26 = arith.constant 8 : i32
    %41 = arith.muli %9, %c8_i32_26 : i32
    %c4_i32 = arith.constant 4 : i32
    %42 = arith.addi %41, %c4_i32 : i32
    %c0_i32_27 = arith.constant 0 : i32
    %c0_i32_28 = arith.constant 0 : i32
    %43 = tpu.memref_slice %arg2[%c0_i32_27, %c0_i32_28] : memref<64x32xf32, #tpu.memory_space<any>> -> memref<1x32xf32, #tpu.memory_space<any>>
    %c0_i32_29 = arith.constant 0 : i32
    %44 = tpu.memref_slice %arg4[%42, %c0_i32_29] : memref<16x32xf32, #tpu.memory_space<vmem>> -> memref<1x32xf32, #tpu.memory_space<vmem>>
    %45 = tpu.memref_slice %arg5[%9] : memref<2x!tpu.dma_semaphore, #tpu.memory_space<semaphore_mem>> -> memref<1x!tpu.dma_semaphore, #tpu.memory_space<semaphore_mem>>
    %46 = tpu.memref_squeeze %45 : memref<1x!tpu.dma_semaphore, #tpu.memory_space<semaphore_mem>> -> memref<!tpu.dma_semaphore, #tpu.memory_space<semaphore_mem>>
    tpu.wait_dma2 semaphore(%46 : memref<!tpu.dma_semaphore, #tpu.memory_space<semaphore_mem>>) src(%43 : memref<1x32xf32, #tpu.memory_space<any>>) dst(%44 : memref<1x32xf32, #tpu.memory_space<vmem>>)
    %c8_i32_30 = arith.constant 8 : i32
    %47 = arith.muli %9, %c8_i32_30 : i32
    %c5_i32 = arith.constant 5 : i32
    %48 = arith.addi %47, %c5_i32 : i32
    %c0_i32_31 = arith.constant 0 : i32
    %c0_i32_32 = arith.constant 0 : i32
    %49 = tpu.memref_slice %arg2[%c0_i32_31, %c0_i32_32] : memref<64x32xf32, #tpu.memory_space<any>> -> memref<1x32xf32, #tpu.memory_space<any>>
    %c0_i32_33 = arith.constant 0 : i32
    %50 = tpu.memref_slice %arg4[%48, %c0_i32_33] : memref<16x32xf32, #tpu.memory_space<vmem>> -> memref<1x32xf32, #tpu.memory_space<vmem>>
    %51 = tpu.memref_slice %arg5[%9] : memref<2x!tpu.dma_semaphore, #tpu.memory_space<semaphore_mem>> -> memref<1x!tpu.dma_semaphore, #tpu.memory_space<semaphore_mem>>
    %52 = tpu.memref_squeeze %51 : memref<1x!tpu.dma_semaphore, #tpu.memory_space<semaphore_mem>> -> memref<!tpu.dma_semaphore, #tpu.memory_space<semaphore_mem>>
    tpu.wait_dma2 semaphore(%52 : memref<!tpu.dma_semaphore, #tpu.memory_space<semaphore_mem>>) src(%49 : memref<1x32xf32, #tpu.memory_space<any>>) dst(%50 : memref<1x32xf32, #tpu.memory_space<vmem>>)
    %c8_i32_34 = arith.constant 8 : i32
    %53 = arith.muli %9, %c8_i32_34 : i32
    %c6_i32 = arith.constant 6 : i32
    %54 = arith.addi %53, %c6_i32 : i32
    %c0_i32_35 = arith.constant 0 : i32
    %c0_i32_36 = arith.constant 0 : i32
    %55 = tpu.memref_slice %arg2[%c0_i32_35, %c0_i32_36] : memref<64x32xf32, #tpu.memory_space<any>> -> memref<1x32xf32, #tpu.memory_space<any>>
    %c0_i32_37 = arith.constant 0 : i32
    %56 = tpu.memref_slice %arg4[%54, %c0_i32_37] : memref<16x32xf32, #tpu.memory_space<vmem>> -> memref<1x32xf32, #tpu.memory_space<vmem>>
    %57 = tpu.memref_slice %arg5[%9] : memref<2x!tpu.dma_semaphore, #tpu.memory_space<semaphore_mem>> -> memref<1x!tpu.dma_semaphore, #tpu.memory_space<semaphore_mem>>
    %58 = tpu.memref_squeeze %57 : memref<1x!tpu.dma_semaphore, #tpu.memory_space<semaphore_mem>> -> memref<!tpu.dma_semaphore, #tpu.memory_space<semaphore_mem>>
    tpu.wait_dma2 semaphore(%58 : memref<!tpu.dma_semaphore, #tpu.memory_space<semaphore_mem>>) src(%55 : memref<1x32xf32, #tpu.memory_space<any>>) dst(%56 : memref<1x32xf32, #tpu.memory_space<vmem>>)
    %c8_i32_38 = arith.constant 8 : i32
    %59 = arith.muli %9, %c8_i32_38 : i32
    %c7_i32 = arith.constant 7 : i32
    %60 = arith.addi %59, %c7_i32 : i32
    %c0_i32_39 = arith.constant 0 : i32
    %c0_i32_40 = arith.constant 0 : i32
    %61 = tpu.memref_slice %arg2[%c0_i32_39, %c0_i32_40] : memref<64x32xf32, #tpu.memory_space<any>> -> memref<1x32xf32, #tpu.memory_space<any>>
    %c0_i32_41 = arith.constant 0 : i32
    %62 = tpu.memref_slice %arg4[%60, %c0_i32_41] : memref<16x32xf32, #tpu.memory_space<vmem>> -> memref<1x32xf32, #tpu.memory_space<vmem>>
    %63 = tpu.memref_slice %arg5[%9] : memref<2x!tpu.dma_semaphore, #tpu.memory_space<semaphore_mem>> -> memref<1x!tpu.dma_semaphore, #tpu.memory_space<semaphore_mem>>
    %64 = tpu.memref_squeeze %63 : memref<1x!tpu.dma_semaphore, #tpu.memory_space<semaphore_mem>> -> memref<!tpu.dma_semaphore, #tpu.memory_space<semaphore_mem>>
    tpu.wait_dma2 semaphore(%64 : memref<!tpu.dma_semaphore, #tpu.memory_space<semaphore_mem>>) src(%61 : memref<1x32xf32, #tpu.memory_space<any>>) dst(%62 : memref<1x32xf32, #tpu.memory_space<vmem>>)
    %c8_i32_42 = arith.constant 8 : i32
    %65 = arith.muli %9, %c8_i32_42 : i32
    %66 = tpu.assume_multiple %65, 8 : i32
    %67 = arith.index_cast %66 : i32 to index
    %c0 = arith.constant 0 : index
    %68 = vector.load %arg4[%67, %c0] : memref<16x32xf32, #tpu.memory_space<vmem>>, vector<8x32xf32>
    %cst = arith.constant 5.65685415 : f32
    %69 = vector.broadcast %cst : f32 to vector<8x32xf32>
    %70 = arith.mulf %68, %69 : vector<8x32xf32>
    %c0_43 = arith.constant 0 : index
    %c0_44 = arith.constant 0 : index
    %71 = vector.load %arg3[%c0_43, %c0_44] : memref<8x32xf32, #tpu.memory_space<vmem>>, vector<8x32xf32>
    tpu.vector_store %arg3[%c0_43, %c0_44], %70 {strides = array<i32>} : memref<8x32xf32, #tpu.memory_space<vmem>>, vector<8x32xf32>,
    return
  }
  func.func @transform_1(%arg0: i32, %arg1: memref<16xi32, #tpu.memory_space<smem>>) -> (i32, i32) {
    %c0_i32 = arith.constant 0 : i32
    %c0_i32_0 = arith.constant 0 : i32
    return %arg0, %c0_i32 : i32, i32
  }
}

</mosaic_0001>

<llo_original>
// kernel: tpu_custom_call.1
$region0: #{tpu_custom_call.1}
  #allocation0 [shape = 'u32[]', space=smem, size = 0x4, offset = 0x4, fixed_abs, tag = 'smem constant byte address 0x4 - core index']
  #allocation1 [shape = 'u32[72,128]{1,0:T(1,128)}', space=vmem, size = 0x9000, scoped, tag = 'internal scratch']
  #allocation2 [shape = 'f32[16,32]{1,0:T(8,128)}', space=vmem, size = 0x2000, scoped, tag = 'scratch operand']
  #allocation3 [shape = 's32[2]{0}', space=sflag, size = 0x8, scoped, tag = 'scratch operand']
  #allocation4 [shape = 's32[1]{0}', space=sflag, size = 0x4, scoped, tag = 'scoped memory for tpu_custom_call.1']
  #allocation5 [shape = 'u8[512]{0}', space=smem, size = 0x200, scoped, tag = 'prefetched SMEM operand 0']
  #allocation8 [shape = 's32[]', space=sflag, size = 0x4, offset = 0, fixed_abs, tag = 'sflag constant byte address 0x0 - dummy sync flag']
  #allocation9 [shape = 's32[]', space=sflag, size = 0x4, offset = 0, fixed_abs, tag = 'sflag constant byte address 0x0 - dummy sync flag']
  #allocation10 [shape = 's32[]', space=sflag, size = 0x4, offset = 0, fixed_abs, tag = 'sflag constant byte address 0x0 - dummy sync flag']
  #allocation11 [shape = 's32[]', space=sflag, size = 0x4, offset = 0, fixed_abs, tag = 'sflag constant byte address 0x0 - dummy sync flag']
  #allocation12 [shape = 's32[]', space=sflag, size = 0x4, offset = 0, fixed_abs, tag = 'sflag constant byte address 0x0 - dummy sync flag']
  #allocation13 [shape = 's32[]', space=sflag, size = 0x4, offset = 0, fixed_abs, tag = 'sflag constant byte address 0x0 - dummy sync flag']
  #allocation14 [shape = 's32[]', space=sflag, size = 0x4, offset = 0, fixed_abs, tag = 'sflag constant byte address 0x0 - dummy sync flag']
  #allocation15 [shape = 's32[]', space=sflag, size = 0x4, offset = 0, fixed_abs, tag = 'sflag constant byte address 0x0 - dummy sync flag']
  #allocation16 [shape = 's32[]', space=sflag, size = 0x4, offset = 0, fixed_abs, tag = 'sflag constant byte address 0x0 - dummy sync flag']
  #allocation17 [shape = 's32[]', space=sflag, size = 0x4, offset = 0, fixed_abs, tag = 'sflag constant byte address 0x0 - dummy sync flag']
  #allocation18 [shape = 's32[]', space=sflag, size = 0x4, offset = 0, fixed_abs, tag = 'sflag constant byte address 0x0 - dummy sync flag']
  #allocation19 [shape = 's32[]', space=sflag, size = 0x4, offset = 0, fixed_abs, tag = 'sflag constant byte address 0x0 - dummy sync flag']
  #allocation20 [shape = 's32[]', space=sflag, size = 0x4, offset = 0, fixed_abs, tag = 'sflag constant byte address 0x0 - dummy sync flag']
  #allocation21 [shape = 's32[]', space=sflag, size = 0x4, offset = 0, fixed_abs, tag = 'sflag constant byte address 0x0 - dummy sync flag']
  #allocation22 [shape = 's32[]', space=sflag, size = 0x4, offset = 0, fixed_abs, tag = 'sflag constant byte address 0x0 - dummy sync flag']
  #allocation23 [shape = 's32[]', space=sflag, size = 0x4, offset = 0, fixed_abs, tag = 'sflag constant byte address 0x0 - dummy sync flag']
  %s0 = inlined_call_operand.vmem [shape: s32[16], index: 0, kind: input, shape index: {}]
  %s1 = inlined_call_operand.vmem [shape: f32[64,32], index: 1, kind: input, shape index: {}]
  %s2 = inlined_call_operand.hbm [shape: f32[16,32], index: 2, kind: output, shape index: {}]
  %s3 = sld [smem:[#allocation0]]
  $region513: #{tpu_custom_call.1} parent=0
    _
  %s5 = ssub.s32 1, %s3
  %s6 = scalar_select 0, %s5, %s3
  %s8 = sshll.u32 %s0, 4
  %s9 = int_to_ptr.vmem [resolvable:$true] %s8
  %11 = dma.vmem_to_smem %s9, 16, [#allocation5], [#allocation4]
  %13 = dma.done [#allocation4], 16
  %14 = sfence
  $region1: #{tpu_custom_call.1} parent=0
    #allocation6 [shape = 'u8[8192]{0}', space=vmem, size = 0x2000, scoped, tag = 'output window, operand 0']
    #allocation7 [shape = 's32[2]{0}', space=sflag, size = 0x8, scoped, tag = 'scoped memory for tpu_custom_call.1']
    %15 = vsyncpa [#allocation7], 0
    %s16 = scalar_lea.sflag [#allocation7], 1
    %17 = vsyncpa %s16, 0
    loop: start=0, step=1, limit=3
    $region2: #{tpu_custom_call.1} parent=1 // loop_pre_header
      _
    $region3: #{tpu_custom_call.1} parent=1 // loop_header
      %s19 = sphi 0, %s23
      %p20 = scmp.ge.s32.totalorder %s19, 3
      %s28 = sphi 0, %s30
      %s31 = sphi 0, %s28
      %s41 = sphi 0, %s31
    $region4: #{tpu_custom_call.1} parent=1 // loop_header_branch
      %22 = sbr.rel (%p20) target = $region8
    $region5: #{tpu_custom_call.1} parent=1 // loop_body
      %s24 = ssub.s32 %s19, 1
      %s25 = sadd.s32 %s19, 1
      %s26 = ssub.s32 %s19, %s25
      %p27 = scmp.eq.s32.totalorder %s26, 0
      %s29 = sadd.s32 %s28, 1
      %s30 = scalar_select %p27, %s28, %s29
      %p32 = pneg %p27
      %p33 = scmp.eq.s32.totalorder %s19, 1
      %p34 = por %p32, %p33
      %p35 = scmp.ne.s32.totalorder %s28, %s31
      %p36 = scmp.eq.s32.totalorder %s19, 0
      %p37 = por %p35, %p36
      %p38 = scmp.ne.s32.totalorder %s28, %s31
      %p39 = scmp.eq.s32.totalorder %s24, 1
      %p40 = por %p38, %p39
      %p42 = scmp.ne.s32.totalorder %s31, %s41
      %p43 = scmp.eq.s32.totalorder %s24, 0
      %p44 = por %p42, %p43
      %p45 = scmp.lt.s32.totalorder %s19, 2
      // Predicated region
      $region9: #{tpu_custom_call.1} parent=5 // pred_check
        %p46 = pneg %p45
      $region10: #{tpu_custom_call.1} parent=5 // pred_check_branch
        %48 = sbr.rel (%p46) target = $region12
      $region11: #{tpu_custom_call.1} parent=5 // pred_region
        %p49 = pneg %p37
        %p50 = pneg %p34
        %s51 = sand.u32 %s28, 1
        %s52 = scalar_lea.sflag [#allocation7], %s51
        %s53 = sand.u32 %s28, 1
        %s54 = smul.addr %s53, 8
        %s55 = scalar_lea.vmem [#allocation6], %s54
        %p56 = scmp.lt.s32.totalorder %s19, 0
        %s57 = ssub.s32 0, %s19
        %s58 = scalar_select %p56, %s57, %s19
        %s59 = sand.u32 %s58, 1
        %s60 = ssub.s32 0, %s59
        %s61 = scalar_select %p56, %s60, %s59
        %p62 = scmp.ne.s32.totalorder %s61, 0
        %p63 = scmp.lt.s32.totalorder %s61, 0
        %p64 = pnand %p63, %p62
        %p65 = pneg %p64
        %s66 = sadd.s32 %s61, 2
        %s67 = scalar_select %p65, %s66, %s61
        %p68 = scmp.eq.s32.totalorder %s19, 0
        // Predicated region
        $region13: #{tpu_custom_call.1} parent=11 // pred_check
          %p69 = pneg %p68
        $region14: #{tpu_custom_call.1} parent=11 // pred_check_branch
          %71 = sbr.rel (%p69) target = $region16
        $region15: #{tpu_custom_call.1} parent=11 // pred_region
          %s72 = sld [smem:[#allocation5]]
          %s73 = scalar_lea.vmem %s1, %s72
          // Predicated region
          $region17: #{tpu_custom_call.1} parent=15 // pred_check
            _
          $region18: #{tpu_custom_call.1} parent=15 // pred_check_branch
            %75 = sbr.rel target = $region20
          $region19: #{tpu_custom_call.1} parent=15 // pred_region
            // Predicated region
            $region32: #{tpu_custom_call.1} parent=19 // pred_check
              _
            $region33: #{tpu_custom_call.1} parent=19 // pred_check_branch
              %91 = sbr.rel (0) target = $region35
            $region34: #{tpu_custom_call.1} parent=19 // pred_region
              %s93 = ssub.s32 2, 1
              loop: start=0, step=1, limit=1
              $region36: #{tpu_custom_call.1} parent=34 // loop_pre_header
                _
              $region37: #{tpu_custom_call.1} parent=34 // loop_header
                %s95 = sphi 0, %s99
                %p96 = scmp.ge.s32.totalorder %s95, 1
                %s100 = sphi %s73, %s73
                %s101 = sphi [#allocation2], [#allocation2]
              $region38: #{tpu_custom_call.1} parent=34 // loop_header_branch
                %98 = sbr.rel (%p96) target = $region42
              $region39: #{tpu_custom_call.1} parent=34 // loop_body
                %v102 = vld [vmem:[%s100] sm:%s93]
                %103 = vst [vmem:[%s101] sm:%s93] %v102
              $region40: #{tpu_custom_call.1} parent=34 // loop_footer
                %s99 = sadd.s32 1, %s95
              $region41: #{tpu_custom_call.1} parent=34 // loop_footer_branch
                %94 = sbr.rel target = $region37
              $region42: #{tpu_custom_call.1} parent=34 // loop_exit
                _
            $region35: #{tpu_custom_call.1} parent=19 // pred_fallthru
              _
          $region20: #{tpu_custom_call.1} parent=15 // pred_fallthru
            _
          // Predicated region
          $region21: #{tpu_custom_call.1} parent=15 // pred_check
            _
          $region22: #{tpu_custom_call.1} parent=15 // pred_check_branch
            %77 = sbr.rel (0) target = $region24
          $region23: #{tpu_custom_call.1} parent=15 // pred_region
            %s79 = ssub.s32 2, 1
            loop: start=0, step=1, limit=1
            $region25: #{tpu_custom_call.1} parent=23 // loop_pre_header
              _
            $region26: #{tpu_custom_call.1} parent=23 // loop_header
              %s81 = sphi 0, %s85
              %p82 = scmp.ge.s32.totalorder %s81, 1
              %s86 = sphi %s73, %s73
              %s87 = sphi [#allocation2], [#allocation2]
            $region27: #{tpu_custom_call.1} parent=23 // loop_header_branch
              %84 = sbr.rel (%p82) target = $region31
            $region28: #{tpu_custom_call.1} parent=23 // loop_body
              %v88 = vld [vmem:[%s86] sm:%s79]
              %89 = vst [vmem:[%s87] sm:%s79] %v88
            $region29: #{tpu_custom_call.1} parent=23 // loop_footer
              %s85 = sadd.s32 1, %s81
            $region30: #{tpu_custom_call.1} parent=23 // loop_footer_branch
              %80 = sbr.rel target = $region26
            $region31: #{tpu_custom_call.1} parent=23 // loop_exit
              _
          $region24: #{tpu_custom_call.1} parent=15 // pred_fallthru
            _
          // Predicated region
          $region43: #{tpu_custom_call.1} parent=15 // pred_check
            _
          $region44: #{tpu_custom_call.1} parent=15 // pred_check_branch
            %106 = sbr.rel (0) target = $region46
          $region45: #{tpu_custom_call.1} parent=15 // pred_region
            %107 = vsyncadd [#allocation3], 16
          $region46: #{tpu_custom_call.1} parent=15 // pred_fallthru
            _
          %s108 = sld [smem:[#allocation5 + $0x1]]
          %s109 = scalar_lea.vmem %s1, %s108
          %s110 = scalar_lea.vmem [#allocation2], 1
          // Predicated region
          $region47: #{tpu_custom_call.1} parent=15 // pred_check
            _
          $region48: #{tpu_custom_call.1} parent=15 // pred_check_branch
            %112 = sbr.rel target = $region50
          $region49: #{tpu_custom_call.1} parent=15 // pred_region
            // Predicated region
            $region62: #{tpu_custom_call.1} parent=49 // pred_check
              _
            $region63: #{tpu_custom_call.1} parent=49 // pred_check_branch
              %128 = sbr.rel (0) target = $region65
            $region64: #{tpu_custom_call.1} parent=49 // pred_region
              %s130 = ssub.s32 2, 1
              loop: start=0, step=1, limit=1
              $region66: #{tpu_custom_call.1} parent=64 // loop_pre_header
                _
              $region67: #{tpu_custom_call.1} parent=64 // loop_header
                %s132 = sphi 0, %s136
                %p133 = scmp.ge.s32.totalorder %s132, 1
                %s137 = sphi %s109, %s109
                %s138 = sphi %s110, %s110
              $region68: #{tpu_custom_call.1} parent=64 // loop_header_branch
                %135 = sbr.rel (%p133) target = $region72
              $region69: #{tpu_custom_call.1} parent=64 // loop_body
                %v139 = vld [vmem:[%s137] sm:%s130]
                %140 = vst [vmem:[%s138] sm:%s130] %v139
              $region70: #{tpu_custom_call.1} parent=64 // loop_footer
                %s136 = sadd.s32 1, %s132
              $region71: #{tpu_custom_call.1} parent=64 // loop_footer_branch
                %131 = sbr.rel target = $region67
              $region72: #{tpu_custom_call.1} parent=64 // loop_exit
                _
            $region65: #{tpu_custom_call.1} parent=49 // pred_fallthru
              _
          $region50: #{tpu_custom_call.1} parent=15 // pred_fallthru
            _
          // Predicated region
          $region51: #{tpu_custom_call.1} parent=15 // pred_check
            _
          $region52: #{tpu_custom_call.1} parent=15 // pred_check_branch
            %114 = sbr.rel (0) target = $region54
          $region53: #{tpu_custom_call.1} parent=15 // pred_region
            %s116 = ssub.s32 2, 1
            loop: start=0, step=1, limit=1
            $region55: #{tpu_custom_call.1} parent=53 // loop_pre_header
              _
            $region56: #{tpu_custom_call.1} parent=53 // loop_header
              %s118 = sphi 0, %s122
              %p119 = scmp.ge.s32.totalorder %s118, 1
              %s123 = sphi %s109, %s109
              %s124 = sphi %s110, %s110
            $region57: #{tpu_custom_call.1} parent=53 // loop_header_branch
              %121 = sbr.rel (%p119) target = $region61
            $region58: #{tpu_custom_call.1} parent=53 // loop_body
              %v125 = vld [vmem:[%s123] sm:%s116]
              %126 = vst [vmem:[%s124] sm:%s116] %v125
            $region59: #{tpu_custom_call.1} parent=53 // loop_footer
              %s122 = sadd.s32 1, %s118
            $region60: #{tpu_custom_call.1} parent=53 // loop_footer_branch
              %117 = sbr.rel target = $region56
            $region61: #{tpu_custom_call.1} parent=53 // loop_exit
              _
          $region54: #{tpu_custom_call.1} parent=15 // pred_fallthru
            _
          // Predicated region
          $region73: #{tpu_custom_call.1} parent=15 // pred_check
            _
          $region74: #{tpu_custom_call.1} parent=15 // pred_check_branch
            %143 = sbr.rel (0) target = $region76
          $region75: #{tpu_custom_call.1} parent=15 // pred_region
            %144 = vsyncadd [#allocation3], 16
          $region76: #{tpu_custom_call.1} parent=15 // pred_fallthru
            _
          %s145 = sld [smem:[#allocation5 + $0x2]]
          %s146 = scalar_lea.vmem %s1, %s145
          %s147 = scalar_lea.vmem [#allocation2], 2
          // Predicated region
          $region77: #{tpu_custom_call.1} parent=15 // pred_check
            _
          $region78: #{tpu_custom_call.1} parent=15 // pred_check_branch
            %149 = sbr.rel target = $region80
          $region79: #{tpu_custom_call.1} parent=15 // pred_region
            // Predicated region
            $region92: #{tpu_custom_call.1} parent=79 // pred_check
              _
            $region93: #{tpu_custom_call.1} parent=79 // pred_check_branch
              %165 = sbr.rel (0) target = $region95
            $region94: #{tpu_custom_call.1} parent=79 // pred_region
              %s167 = ssub.s32 2, 1
              loop: start=0, step=1, limit=1
              $region96: #{tpu_custom_call.1} parent=94 // loop_pre_header
                _
              $region97: #{tpu_custom_call.1} parent=94 // loop_header
                %s169 = sphi 0, %s173
                %p170 = scmp.ge.s32.totalorder %s169, 1
                %s174 = sphi %s146, %s146
                %s175 = sphi %s147, %s147
              $region98: #{tpu_custom_call.1} parent=94 // loop_header_branch
                %172 = sbr.rel (%p170) target = $region102
              $region99: #{tpu_custom_call.1} parent=94 // loop_body
                %v176 = vld [vmem:[%s174] sm:%s167]
                %177 = vst [vmem:[%s175] sm:%s167] %v176
              $region100: #{tpu_custom_call.1} parent=94 // loop_footer
                %s173 = sadd.s32 1, %s169
              $region101: #{tpu_custom_call.1} parent=94 // loop_footer_branch
                %168 = sbr.rel target = $region97
              $region102: #{tpu_custom_call.1} parent=94 // loop_exit
                _
            $region95: #{tpu_custom_call.1} parent=79 // pred_fallthru
              _
          $region80: #{tpu_custom_call.1} parent=15 // pred_fallthru
            _
          // Predicated region
          $region81: #{tpu_custom_call.1} parent=15 // pred_check
            _
          $region82: #{tpu_custom_call.1} parent=15 // pred_check_branch
            %151 = sbr.rel (0) target = $region84
          $region83: #{tpu_custom_call.1} parent=15 // pred_region
            %s153 = ssub.s32 2, 1
            loop: start=0, step=1, limit=1
            $region85: #{tpu_custom_call.1} parent=83 // loop_pre_header
              _
            $region86: #{tpu_custom_call.1} parent=83 // loop_header
              %s155 = sphi 0, %s159
              %p156 = scmp.ge.s32.totalorder %s155, 1
              %s160 = sphi %s146, %s146
              %s161 = sphi %s147, %s147
            $region87: #{tpu_custom_call.1} parent=83 // loop_header_branch
              %158 = sbr.rel (%p156) target = $region91
            $region88: #{tpu_custom_call.1} parent=83 // loop_body
              %v162 = vld [vmem:[%s160] sm:%s153]
              %163 = vst [vmem:[%s161] sm:%s153] %v162
            $region89: #{tpu_custom_call.1} parent=83 // loop_footer
              %s159 = sadd.s32 1, %s155
            $region90: #{tpu_custom_call.1} parent=83 // loop_footer_branch
              %154 = sbr.rel target = $region86
            $region91: #{tpu_custom_call.1} parent=83 // loop_exit
              _
          $region84: #{tpu_custom_call.1} parent=15 // pred_fallthru
            _
          // Predicated region
          $region103: #{tpu_custom_call.1} parent=15 // pred_check
            _
          $region104: #{tpu_custom_call.1} parent=15 // pred_check_branch
            %180 = sbr.rel (0) target = $region106
          $region105: #{tpu_custom_call.1} parent=15 // pred_region
            %181 = vsyncadd [#allocation3], 16
          $region106: #{tpu_custom_call.1} parent=15 // pred_fallthru
            _
          %s182 = sld [smem:[#allocation5 + $0x3]]
          %s183 = scalar_lea.vmem %s1, %s182
          %s184 = scalar_lea.vmem [#allocation2], 3
          // Predicated region
          $region107: #{tpu_custom_call.1} parent=15 // pred_check
            _
          $region108: #{tpu_custom_call.1} parent=15 // pred_check_branch
            %186 = sbr.rel target = $region110
          $region109: #{tpu_custom_call.1} parent=15 // pred_region
            // Predicated region
            $region122: #{tpu_custom_call.1} parent=109 // pred_check
              _
            $region123: #{tpu_custom_call.1} parent=109 // pred_check_branch
              %202 = sbr.rel (0) target = $region125
            $region124: #{tpu_custom_call.1} parent=109 // pred_region
              %s204 = ssub.s32 2, 1
              loop: start=0, step=1, limit=1
              $region126: #{tpu_custom_call.1} parent=124 // loop_pre_header
                _
              $region127: #{tpu_custom_call.1} parent=124 // loop_header
                %s206 = sphi 0, %s210
                %p207 = scmp.ge.s32.totalorder %s206, 1
                %s211 = sphi %s183, %s183
                %s212 = sphi %s184, %s184
              $region128: #{tpu_custom_call.1} parent=124 // loop_header_branch
                %209 = sbr.rel (%p207) target = $region132
              $region129: #{tpu_custom_call.1} parent=124 // loop_body
                %v213 = vld [vmem:[%s211] sm:%s204]
                %214 = vst [vmem:[%s212] sm:%s204] %v213
              $region130: #{tpu_custom_call.1} parent=124 // loop_footer
                %s210 = sadd.s32 1, %s206
              $region131: #{tpu_custom_call.1} parent=124 // loop_footer_branch
                %205 = sbr.rel target = $region127
              $region132: #{tpu_custom_call.1} parent=124 // loop_exit
                _
            $region125: #{tpu_custom_call.1} parent=109 // pred_fallthru
              _
          $region110: #{tpu_custom_call.1} parent=15 // pred_fallthru
            _
          // Predicated region
          $region111: #{tpu_custom_call.1} parent=15 // pred_check
            _
          $region112: #{tpu_custom_call.1} parent=15 // pred_check_branch
            %188 = sbr.rel (0) target = $region114
          $region113: #{tpu_custom_call.1} parent=15 // pred_region
            %s190 = ssub.s32 2, 1
            loop: start=0, step=1, limit=1
            $region115: #{tpu_custom_call.1} parent=113 // loop_pre_header
              _
            $region116: #{tpu_custom_call.1} parent=113 // loop_header
              %s192 = sphi 0, %s196
              %p193 = scmp.ge.s32.totalorder %s192, 1
              %s197 = sphi %s183, %s183
              %s198 = sphi %s184, %s184
            $region117: #{tpu_custom_call.1} parent=113 // loop_header_branch
              %195 = sbr.rel (%p193) target = $region121
            $region118: #{tpu_custom_call.1} parent=113 // loop_body
              %v199 = vld [vmem:[%s197] sm:%s190]
              %200 = vst [vmem:[%s198] sm:%s190] %v199
            $region119: #{tpu_custom_call.1} parent=113 // loop_footer
              %s196 = sadd.s32 1, %s192
            $region120: #{tpu_custom_call.1} parent=113 // loop_footer_branch
              %191 = sbr.rel target = $region116
            $region121: #{tpu_custom_call.1} parent=113 // loop_exit
              _
          $region114: #{tpu_custom_call.1} parent=15 // pred_fallthru
            _
          // Predicated region
          $region133: #{tpu_custom_call.1} parent=15 // pred_check
            _
          $region134: #{tpu_custom_call.1} parent=15 // pred_check_branch
            %217 = sbr.rel (0) target = $region136
          $region135: #{tpu_custom_call.1} parent=15 // pred_region
            %218 = vsyncadd [#allocation3], 16
          $region136: #{tpu_custom_call.1} parent=15 // pred_fallthru
            _
          %s219 = sld [smem:[#allocation5 + $0x4]]
          %s220 = scalar_lea.vmem %s1, %s219
          %s221 = scalar_lea.vmem [#allocation2], 4
          // Predicated region
          $region137: #{tpu_custom_call.1} parent=15 // pred_check
            _
          $region138: #{tpu_custom_call.1} parent=15 // pred_check_branch
            %223 = sbr.rel target = $region140
          $region139: #{tpu_custom_call.1} parent=15 // pred_region
            // Predicated region
            $region152: #{tpu_custom_call.1} parent=139 // pred_check
              _
            $region153: #{tpu_custom_call.1} parent=139 // pred_check_branch
              %239 = sbr.rel (0) target = $region155
            $region154: #{tpu_custom_call.1} parent=139 // pred_region
              %s241 = ssub.s32 2, 1
              loop: start=0, step=1, limit=1
              $region156: #{tpu_custom_call.1} parent=154 // loop_pre_header
                _
              $region157: #{tpu_custom_call.1} parent=154 // loop_header
                %s243 = sphi 0, %s247
                %p244 = scmp.ge.s32.totalorder %s243, 1
                %s248 = sphi %s220, %s220
                %s249 = sphi %s221, %s221
              $region158: #{tpu_custom_call.1} parent=154 // loop_header_branch
                %246 = sbr.rel (%p244) target = $region162
              $region159: #{tpu_custom_call.1} parent=154 // loop_body
                %v250 = vld [vmem:[%s248] sm:%s241]
                %251 = vst [vmem:[%s249] sm:%s241] %v250
              $region160: #{tpu_custom_call.1} parent=154 // loop_footer
                %s247 = sadd.s32 1, %s243
              $region161: #{tpu_custom_call.1} parent=154 // loop_footer_branch
                %242 = sbr.rel target = $region157
              $region162: #{tpu_custom_call.1} parent=154 // loop_exit
                _
            $region155: #{tpu_custom_call.1} parent=139 // pred_fallthru
              _
          $region140: #{tpu_custom_call.1} parent=15 // pred_fallthru
            _
          // Predicated region
          $region141: #{tpu_custom_call.1} parent=15 // pred_check
            _
          $region142: #{tpu_custom_call.1} parent=15 // pred_check_branch
            %225 = sbr.rel (0) target = $region144
          $region143: #{tpu_custom_call.1} parent=15 // pred_region
            %s227 = ssub.s32 2, 1
            loop: start=0, step=1, limit=1
            $region145: #{tpu_custom_call.1} parent=143 // loop_pre_header
              _
            $region146: #{tpu_custom_call.1} parent=143 // loop_header
              %s229 = sphi 0, %s233
              %p230 = scmp.ge.s32.totalorder %s229, 1
              %s234 = sphi %s220, %s220
              %s235 = sphi %s221, %s221
            $region147: #{tpu_custom_call.1} parent=143 // loop_header_branch
              %232 = sbr.rel (%p230) target = $region151
            $region148: #{tpu_custom_call.1} parent=143 // loop_body
              %v236 = vld [vmem:[%s234] sm:%s227]
              %237 = vst [vmem:[%s235] sm:%s227] %v236
            $region149: #{tpu_custom_call.1} parent=143 // loop_footer
              %s233 = sadd.s32 1, %s229
            $region150: #{tpu_custom_call.1} parent=143 // loop_footer_branch
              %228 = sbr.rel target = $region146
            $region151: #{tpu_custom_call.1} parent=143 // loop_exit
              _
          $region144: #{tpu_custom_call.1} parent=15 // pred_fallthru
            _
          // Predicated region
          $region163: #{tpu_custom_call.1} parent=15 // pred_check
            _
          $region164: #{tpu_custom_call.1} parent=15 // pred_check_branch
            %254 = sbr.rel (0) target = $region166
          $region165: #{tpu_custom_call.1} parent=15 // pred_region
            %255 = vsyncadd [#allocation3], 16
          $region166: #{tpu_custom_call.1} parent=15 // pred_fallthru
            _
          %s256 = sld [smem:[#allocation5 + $0x5]]
          %s257 = scalar_lea.vmem %s1, %s256
          %s258 = scalar_lea.vmem [#allocation2], 5
          // Predicated region
          $region167: #{tpu_custom_call.1} parent=15 // pred_check
            _
          $region168: #{tpu_custom_call.1} parent=15 // pred_check_branch
            %260 = sbr.rel target = $region170
          $region169: #{tpu_custom_call.1} parent=15 // pred_region
            // Predicated region
            $region182: #{tpu_custom_call.1} parent=169 // pred_check
              _
            $region183: #{tpu_custom_call.1} parent=169 // pred_check_branch
              %276 = sbr.rel (0) target = $region185
            $region184: #{tpu_custom_call.1} parent=169 // pred_region
              %s278 = ssub.s32 2, 1
              loop: start=0, step=1, limit=1
              $region186: #{tpu_custom_call.1} parent=184 // loop_pre_header
                _
              $region187: #{tpu_custom_call.1} parent=184 // loop_header
                %s280 = sphi 0, %s284
                %p281 = scmp.ge.s32.totalorder %s280, 1
                %s285 = sphi %s257, %s257
                %s286 = sphi %s258, %s258
              $region188: #{tpu_custom_call.1} parent=184 // loop_header_branch
                %283 = sbr.rel (%p281) target = $region192
              $region189: #{tpu_custom_call.1} parent=184 // loop_body
                %v287 = vld [vmem:[%s285] sm:%s278]
                %288 = vst [vmem:[%s286] sm:%s278] %v287
              $region190: #{tpu_custom_call.1} parent=184 // loop_footer
                %s284 = sadd.s32 1, %s280
              $region191: #{tpu_custom_call.1} parent=184 // loop_footer_branch
                %279 = sbr.rel target = $region187
              $region192: #{tpu_custom_call.1} parent=184 // loop_exit
                _
            $region185: #{tpu_custom_call.1} parent=169 // pred_fallthru
              _
          $region170: #{tpu_custom_call.1} parent=15 // pred_fallthru
            _
          // Predicated region
          $region171: #{tpu_custom_call.1} parent=15 // pred_check
            _
          $region172: #{tpu_custom_call.1} parent=15 // pred_check_branch
            %262 = sbr.rel (0) target = $region174
          $region173: #{tpu_custom_call.1} parent=15 // pred_region
            %s264 = ssub.s32 2, 1
            loop: start=0, step=1, limit=1
            $region175: #{tpu_custom_call.1} parent=173 // loop_pre_header
              _
            $region176: #{tpu_custom_call.1} parent=173 // loop_header
              %s266 = sphi 0, %s270
              %p267 = scmp.ge.s32.totalorder %s266, 1
              %s271 = sphi %s257, %s257
              %s272 = sphi %s258, %s258
            $region177: #{tpu_custom_call.1} parent=173 // loop_header_branch
              %269 = sbr.rel (%p267) target = $region181
            $region178: #{tpu_custom_call.1} parent=173 // loop_body
              %v273 = vld [vmem:[%s271] sm:%s264]
              %274 = vst [vmem:[%s272] sm:%s264] %v273
            $region179: #{tpu_custom_call.1} parent=173 // loop_footer
              %s270 = sadd.s32 1, %s266
            $region180: #{tpu_custom_call.1} parent=173 // loop_footer_branch
              %265 = sbr.rel target = $region176
            $region181: #{tpu_custom_call.1} parent=173 // loop_exit
              _
          $region174: #{tpu_custom_call.1} parent=15 // pred_fallthru
            _
          // Predicated region
          $region193: #{tpu_custom_call.1} parent=15 // pred_check
            _
          $region194: #{tpu_custom_call.1} parent=15 // pred_check_branch
            %291 = sbr.rel (0) target = $region196
          $region195: #{tpu_custom_call.1} parent=15 // pred_region
            %292 = vsyncadd [#allocation3], 16
          $region196: #{tpu_custom_call.1} parent=15 // pred_fallthru
            _
          %s293 = sld [smem:[#allocation5 + $0x6]]
          %s294 = scalar_lea.vmem %s1, %s293
          %s295 = scalar_lea.vmem [#allocation2], 6
          // Predicated region
          $region197: #{tpu_custom_call.1} parent=15 // pred_check
            _
          $region198: #{tpu_custom_call.1} parent=15 // pred_check_branch
            %297 = sbr.rel target = $region200
          $region199: #{tpu_custom_call.1} parent=15 // pred_region
            // Predicated region
            $region212: #{tpu_custom_call.1} parent=199 // pred_check
              _
            $region213: #{tpu_custom_call.1} parent=199 // pred_check_branch
              %313 = sbr.rel (0) target = $region215
            $region214: #{tpu_custom_call.1} parent=199 // pred_region
              %s315 = ssub.s32 2, 1
              loop: start=0, step=1, limit=1
              $region216: #{tpu_custom_call.1} parent=214 // loop_pre_header
                _
              $region217: #{tpu_custom_call.1} parent=214 // loop_header
                %s317 = sphi 0, %s321
                %p318 = scmp.ge.s32.totalorder %s317, 1
                %s322 = sphi %s294, %s294
                %s323 = sphi %s295, %s295
              $region218: #{tpu_custom_call.1} parent=214 // loop_header_branch
                %320 = sbr.rel (%p318) target = $region222
              $region219: #{tpu_custom_call.1} parent=214 // loop_body
                %v324 = vld [vmem:[%s322] sm:%s315]
                %325 = vst [vmem:[%s323] sm:%s315] %v324
              $region220: #{tpu_custom_call.1} parent=214 // loop_footer
                %s321 = sadd.s32 1, %s317
              $region221: #{tpu_custom_call.1} parent=214 // loop_footer_branch
                %316 = sbr.rel target = $region217
              $region222: #{tpu_custom_call.1} parent=214 // loop_exit
                _
            $region215: #{tpu_custom_call.1} parent=199 // pred_fallthru
              _
          $region200: #{tpu_custom_call.1} parent=15 // pred_fallthru
            _
          // Predicated region
          $region201: #{tpu_custom_call.1} parent=15 // pred_check
            _
          $region202: #{tpu_custom_call.1} parent=15 // pred_check_branch
            %299 = sbr.rel (0) target = $region204
          $region203: #{tpu_custom_call.1} parent=15 // pred_region
            %s301 = ssub.s32 2, 1
            loop: start=0, step=1, limit=1
            $region205: #{tpu_custom_call.1} parent=203 // loop_pre_header
              _
            $region206: #{tpu_custom_call.1} parent=203 // loop_header
              %s303 = sphi 0, %s307
              %p304 = scmp.ge.s32.totalorder %s303, 1
              %s308 = sphi %s294, %s294
              %s309 = sphi %s295, %s295
            $region207: #{tpu_custom_call.1} parent=203 // loop_header_branch
              %306 = sbr.rel (%p304) target = $region211
            $region208: #{tpu_custom_call.1} parent=203 // loop_body
              %v310 = vld [vmem:[%s308] sm:%s301]
              %311 = vst [vmem:[%s309] sm:%s301] %v310
            $region209: #{tpu_custom_call.1} parent=203 // loop_footer
              %s307 = sadd.s32 1, %s303
            $region210: #{tpu_custom_call.1} parent=203 // loop_footer_branch
              %302 = sbr.rel target = $region206
            $region211: #{tpu_custom_call.1} parent=203 // loop_exit
              _
          $region204: #{tpu_custom_call.1} parent=15 // pred_fallthru
            _
          // Predicated region
          $region223: #{tpu_custom_call.1} parent=15 // pred_check
            _
          $region224: #{tpu_custom_call.1} parent=15 // pred_check_branch
            %328 = sbr.rel (0) target = $region226
          $region225: #{tpu_custom_call.1} parent=15 // pred_region
            %329 = vsyncadd [#allocation3], 16
          $region226: #{tpu_custom_call.1} parent=15 // pred_fallthru
            _
          %s330 = sld [smem:[#allocation5 + $0x7]]
          %s331 = scalar_lea.vmem %s1, %s330
          %s332 = scalar_lea.vmem [#allocation2], 7
          // Predicated region
          $region227: #{tpu_custom_call.1} parent=15 // pred_check
            _
          $region228: #{tpu_custom_call.1} parent=15 // pred_check_branch
            %334 = sbr.rel target = $region230
          $region229: #{tpu_custom_call.1} parent=15 // pred_region
            // Predicated region
            $region242: #{tpu_custom_call.1} parent=229 // pred_check
              _
            $region243: #{tpu_custom_call.1} parent=229 // pred_check_branch
              %350 = sbr.rel (0) target = $region245
            $region244: #{tpu_custom_call.1} parent=229 // pred_region
              %s352 = ssub.s32 2, 1
              loop: start=0, step=1, limit=1
              $region246: #{tpu_custom_call.1} parent=244 // loop_pre_header
                _
              $region247: #{tpu_custom_call.1} parent=244 // loop_header
                %s354 = sphi 0, %s358
                %p355 = scmp.ge.s32.totalorder %s354, 1
                %s359 = sphi %s331, %s331
                %s360 = sphi %s332, %s332
              $region248: #{tpu_custom_call.1} parent=244 // loop_header_branch
                %357 = sbr.rel (%p355) target = $region252
              $region249: #{tpu_custom_call.1} parent=244 // loop_body
                %v361 = vld [vmem:[%s359] sm:%s352]
                %362 = vst [vmem:[%s360] sm:%s352] %v361
              $region250: #{tpu_custom_call.1} parent=244 // loop_footer
                %s358 = sadd.s32 1, %s354
              $region251: #{tpu_custom_call.1} parent=244 // loop_footer_branch
                %353 = sbr.rel target = $region247
              $region252: #{tpu_custom_call.1} parent=244 // loop_exit
                _
            $region245: #{tpu_custom_call.1} parent=229 // pred_fallthru
              _
          $region230: #{tpu_custom_call.1} parent=15 // pred_fallthru
            _
          // Predicated region
          $region231: #{tpu_custom_call.1} parent=15 // pred_check
            _
          $region232: #{tpu_custom_call.1} parent=15 // pred_check_branch
            %336 = sbr.rel (0) target = $region234
          $region233: #{tpu_custom_call.1} parent=15 // pred_region
            %s338 = ssub.s32 2, 1
            loop: start=0, step=1, limit=1
            $region235: #{tpu_custom_call.1} parent=233 // loop_pre_header
              _
            $region236: #{tpu_custom_call.1} parent=233 // loop_header
              %s340 = sphi 0, %s344
              %p341 = scmp.ge.s32.totalorder %s340, 1
              %s345 = sphi %s331, %s331
              %s346 = sphi %s332, %s332
            $region237: #{tpu_custom_call.1} parent=233 // loop_header_branch
              %343 = sbr.rel (%p341) target = $region241
            $region238: #{tpu_custom_call.1} parent=233 // loop_body
              %v347 = vld [vmem:[%s345] sm:%s338]
              %348 = vst [vmem:[%s346] sm:%s338] %v347
            $region239: #{tpu_custom_call.1} parent=233 // loop_footer
              %s344 = sadd.s32 1, %s340
            $region240: #{tpu_custom_call.1} parent=233 // loop_footer_branch
              %339 = sbr.rel target = $region236
            $region241: #{tpu_custom_call.1} parent=233 // loop_exit
              _
          $region234: #{tpu_custom_call.1} parent=15 // pred_fallthru
            _
          // Predicated region
          $region253: #{tpu_custom_call.1} parent=15 // pred_check
            _
          $region254: #{tpu_custom_call.1} parent=15 // pred_check_branch
            %365 = sbr.rel (0) target = $region256
          $region255: #{tpu_custom_call.1} parent=15 // pred_region
            %366 = vsyncadd [#allocation3], 16
          $region256: #{tpu_custom_call.1} parent=15 // pred_fallthru
            _
        $region16: #{tpu_custom_call.1} parent=11 // pred_fallthru
          _
        %s367 = sadd.s32 %s19, 1
        %p368 = scmp.lt.s32.totalorder %s367, 2
        // Predicated region
        $region257: #{tpu_custom_call.1} parent=11 // pred_check
          %p369 = pneg %p368
        $region258: #{tpu_custom_call.1} parent=11 // pred_check_branch
          %371 = sbr.rel (%p369) target = $region260
        $region259: #{tpu_custom_call.1} parent=11 // pred_region
          %s372 = ssub.s32 1, %s67
          %s373 = smul.u32 %s367, 8
          %s374 = sld [smem:[#allocation5 + %s373]]
          %s375 = smul.u32 %s372, 8
          %s376 = scalar_lea.vmem %s1, %s374
          %s377 = scalar_lea.vmem [#allocation2], %s375
          %s378 = scalar_lea.sflag [#allocation3], %s372
          // Predicated region
          $region261: #{tpu_custom_call.1} parent=259 // pred_check
            _
          $region262: #{tpu_custom_call.1} parent=259 // pred_check_branch
            %380 = sbr.rel target = $region264
          $region263: #{tpu_custom_call.1} parent=259 // pred_region
            // Predicated region
            $region276: #{tpu_custom_call.1} parent=263 // pred_check
              _
            $region277: #{tpu_custom_call.1} parent=263 // pred_check_branch
              %396 = sbr.rel (0) target = $region279
            $region278: #{tpu_custom_call.1} parent=263 // pred_region
              %s398 = ssub.s32 2, 1
              loop: start=0, step=1, limit=1
              $region280: #{tpu_custom_call.1} parent=278 // loop_pre_header
                _
              $region281: #{tpu_custom_call.1} parent=278 // loop_header
                %s400 = sphi 0, %s404
                %p401 = scmp.ge.s32.totalorder %s400, 1
                %s405 = sphi %s376, %s376
                %s406 = sphi %s377, %s377
              $region282: #{tpu_custom_call.1} parent=278 // loop_header_branch
                %403 = sbr.rel (%p401) target = $region286
              $region283: #{tpu_custom_call.1} parent=278 // loop_body
                %v407 = vld [vmem:[%s405] sm:%s398]
                %408 = vst [vmem:[%s406] sm:%s398] %v407
              $region284: #{tpu_custom_call.1} parent=278 // loop_footer
                %s404 = sadd.s32 1, %s400
              $region285: #{tpu_custom_call.1} parent=278 // loop_footer_branch
                %399 = sbr.rel target = $region281
              $region286: #{tpu_custom_call.1} parent=278 // loop_exit
                _
            $region279: #{tpu_custom_call.1} parent=263 // pred_fallthru
              _
          $region264: #{tpu_custom_call.1} parent=259 // pred_fallthru
            _
          // Predicated region
          $region265: #{tpu_custom_call.1} parent=259 // pred_check
            _
          $region266: #{tpu_custom_call.1} parent=259 // pred_check_branch
            %382 = sbr.rel (0) target = $region268
          $region267: #{tpu_custom_call.1} parent=259 // pred_region
            %s384 = ssub.s32 2, 1
            loop: start=0, step=1, limit=1
            $region269: #{tpu_custom_call.1} parent=267 // loop_pre_header
              _
            $region270: #{tpu_custom_call.1} parent=267 // loop_header
              %s386 = sphi 0, %s390
              %p387 = scmp.ge.s32.totalorder %s386, 1
              %s391 = sphi %s376, %s376
              %s392 = sphi %s377, %s377
            $region271: #{tpu_custom_call.1} parent=267 // loop_header_branch
              %389 = sbr.rel (%p387) target = $region275
            $region272: #{tpu_custom_call.1} parent=267 // loop_body
              %v393 = vld [vmem:[%s391] sm:%s384]
              %394 = vst [vmem:[%s392] sm:%s384] %v393
            $region273: #{tpu_custom_call.1} parent=267 // loop_footer
              %s390 = sadd.s32 1, %s386
            $region274: #{tpu_custom_call.1} parent=267 // loop_footer_branch
              %385 = sbr.rel target = $region270
            $region275: #{tpu_custom_call.1} parent=267 // loop_exit
              _
          $region268: #{tpu_custom_call.1} parent=259 // pred_fallthru
            _
          // Predicated region
          $region287: #{tpu_custom_call.1} parent=259 // pred_check
            _
          $region288: #{tpu_custom_call.1} parent=259 // pred_check_branch
            %411 = sbr.rel (0) target = $region290
          $region289: #{tpu_custom_call.1} parent=259 // pred_region
            %412 = vsyncadd %s378, 16
          $region290: #{tpu_custom_call.1} parent=259 // pred_fallthru
            _
          %s413 = sadd.s32 %s373, 1
          %s414 = sld [smem:[#allocation5 + %s413]]
          %s415 = sadd.s32 %s375, 1
          %s416 = scalar_lea.vmem %s1, %s414
          %s417 = scalar_lea.vmem [#allocation2], %s415
          // Predicated region
          $region291: #{tpu_custom_call.1} parent=259 // pred_check
            _
          $region292: #{tpu_custom_call.1} parent=259 // pred_check_branch
            %419 = sbr.rel target = $region294
          $region293: #{tpu_custom_call.1} parent=259 // pred_region
            // Predicated region
            $region306: #{tpu_custom_call.1} parent=293 // pred_check
              _
            $region307: #{tpu_custom_call.1} parent=293 // pred_check_branch
              %435 = sbr.rel (0) target = $region309
            $region308: #{tpu_custom_call.1} parent=293 // pred_region
              %s437 = ssub.s32 2, 1
              loop: start=0, step=1, limit=1
              $region310: #{tpu_custom_call.1} parent=308 // loop_pre_header
                _
              $region311: #{tpu_custom_call.1} parent=308 // loop_header
                %s439 = sphi 0, %s443
                %p440 = scmp.ge.s32.totalorder %s439, 1
                %s444 = sphi %s416, %s416
                %s445 = sphi %s417, %s417
              $region312: #{tpu_custom_call.1} parent=308 // loop_header_branch
                %442 = sbr.rel (%p440) target = $region316
              $region313: #{tpu_custom_call.1} parent=308 // loop_body
                %v446 = vld [vmem:[%s444] sm:%s437]
                %447 = vst [vmem:[%s445] sm:%s437] %v446
              $region314: #{tpu_custom_call.1} parent=308 // loop_footer
                %s443 = sadd.s32 1, %s439
              $region315: #{tpu_custom_call.1} parent=308 // loop_footer_branch
                %438 = sbr.rel target = $region311
              $region316: #{tpu_custom_call.1} parent=308 // loop_exit
                _
            $region309: #{tpu_custom_call.1} parent=293 // pred_fallthru
              _
          $region294: #{tpu_custom_call.1} parent=259 // pred_fallthru
            _
          // Predicated region
          $region295: #{tpu_custom_call.1} parent=259 // pred_check
            _
          $region296: #{tpu_custom_call.1} parent=259 // pred_check_branch
            %421 = sbr.rel (0) target = $region298
          $region297: #{tpu_custom_call.1} parent=259 // pred_region
            %s423 = ssub.s32 2, 1
            loop: start=0, step=1, limit=1
            $region299: #{tpu_custom_call.1} parent=297 // loop_pre_header
              _
            $region300: #{tpu_custom_call.1} parent=297 // loop_header
              %s425 = sphi 0, %s429
              %p426 = scmp.ge.s32.totalorder %s425, 1
              %s430 = sphi %s416, %s416
              %s431 = sphi %s417, %s417
            $region301: #{tpu_custom_call.1} parent=297 // loop_header_branch
              %428 = sbr.rel (%p426) target = $region305
            $region302: #{tpu_custom_call.1} parent=297 // loop_body
              %v432 = vld [vmem:[%s430] sm:%s423]
              %433 = vst [vmem:[%s431] sm:%s423] %v432
            $region303: #{tpu_custom_call.1} parent=297 // loop_footer
              %s429 = sadd.s32 1, %s425
            $region304: #{tpu_custom_call.1} parent=297 // loop_footer_branch
              %424 = sbr.rel target = $region300
            $region305: #{tpu_custom_call.1} parent=297 // loop_exit
              _
          $region298: #{tpu_custom_call.1} parent=259 // pred_fallthru
            _
          // Predicated region
          $region317: #{tpu_custom_call.1} parent=259 // pred_check
            _
          $region318: #{tpu_custom_call.1} parent=259 // pred_check_branch
            %450 = sbr.rel (0) target = $region320
          $region319: #{tpu_custom_call.1} parent=259 // pred_region
            %451 = vsyncadd %s378, 16
          $region320: #{tpu_custom_call.1} parent=259 // pred_fallthru
            _
          %s452 = sadd.s32 %s373, 2
          %s453 = sld [smem:[#allocation5 + %s452]]
          %s454 = sadd.s32 %s375, 2
          %s455 = scalar_lea.vmem %s1, %s453
          %s456 = scalar_lea.vmem [#allocation2], %s454
          // Predicated region
          $region321: #{tpu_custom_call.1} parent=259 // pred_check
            _
          $region322: #{tpu_custom_call.1} parent=259 // pred_check_branch
            %458 = sbr.rel target = $region324
          $region323: #{tpu_custom_call.1} parent=259 // pred_region
            // Predicated region
            $region336: #{tpu_custom_call.1} parent=323 // pred_check
              _
            $region337: #{tpu_custom_call.1} parent=323 // pred_check_branch
              %474 = sbr.rel (0) target = $region339
            $region338: #{tpu_custom_call.1} parent=323 // pred_region
              %s476 = ssub.s32 2, 1
              loop: start=0, step=1, limit=1
              $region340: #{tpu_custom_call.1} parent=338 // loop_pre_header
                _
              $region341: #{tpu_custom_call.1} parent=338 // loop_header
                %s478 = sphi 0, %s482
                %p479 = scmp.ge.s32.totalorder %s478, 1
                %s483 = sphi %s455, %s455
                %s484 = sphi %s456, %s456
              $region342: #{tpu_custom_call.1} parent=338 // loop_header_branch
                %481 = sbr.rel (%p479) target = $region346
              $region343: #{tpu_custom_call.1} parent=338 // loop_body
                %v485 = vld [vmem:[%s483] sm:%s476]
                %486 = vst [vmem:[%s484] sm:%s476] %v485
              $region344: #{tpu_custom_call.1} parent=338 // loop_footer
                %s482 = sadd.s32 1, %s478
              $region345: #{tpu_custom_call.1} parent=338 // loop_footer_branch
                %477 = sbr.rel target = $region341
              $region346: #{tpu_custom_call.1} parent=338 // loop_exit
                _
            $region339: #{tpu_custom_call.1} parent=323 // pred_fallthru
              _
          $region324: #{tpu_custom_call.1} parent=259 // pred_fallthru
            _
          // Predicated region
          $region325: #{tpu_custom_call.1} parent=259 // pred_check
            _
          $region326: #{tpu_custom_call.1} parent=259 // pred_check_branch
            %460 = sbr.rel (0) target = $region328
          $region327: #{tpu_custom_call.1} parent=259 // pred_region
            %s462 = ssub.s32 2, 1
            loop: start=0, step=1, limit=1
            $region329: #{tpu_custom_call.1} parent=327 // loop_pre_header
              _
            $region330: #{tpu_custom_call.1} parent=327 // loop_header
              %s464 = sphi 0, %s468
              %p465 = scmp.ge.s32.totalorder %s464, 1
              %s469 = sphi %s455, %s455
              %s470 = sphi %s456, %s456
            $region331: #{tpu_custom_call.1} parent=327 // loop_header_branch
              %467 = sbr.rel (%p465) target = $region335
            $region332: #{tpu_custom_call.1} parent=327 // loop_body
              %v471 = vld [vmem:[%s469] sm:%s462]
              %472 = vst [vmem:[%s470] sm:%s462] %v471
            $region333: #{tpu_custom_call.1} parent=327 // loop_footer
              %s468 = sadd.s32 1, %s464
            $region334: #{tpu_custom_call.1} parent=327 // loop_footer_branch
              %463 = sbr.rel target = $region330
            $region335: #{tpu_custom_call.1} parent=327 // loop_exit
              _
          $region328: #{tpu_custom_call.1} parent=259 // pred_fallthru
            _
          // Predicated region
          $region347: #{tpu_custom_call.1} parent=259 // pred_check
            _
          $region348: #{tpu_custom_call.1} parent=259 // pred_check_branch
            %489 = sbr.rel (0) target = $region350
          $region349: #{tpu_custom_call.1} parent=259 // pred_region
            %490 = vsyncadd %s378, 16
          $region350: #{tpu_custom_call.1} parent=259 // pred_fallthru
            _
          %s491 = sadd.s32 %s373, 3
          %s492 = sld [smem:[#allocation5 + %s491]]
          %s493 = sadd.s32 %s375, 3
          %s494 = scalar_lea.vmem %s1, %s492
          %s495 = scalar_lea.vmem [#allocation2], %s493
          // Predicated region
          $region351: #{tpu_custom_call.1} parent=259 // pred_check
            _
          $region352: #{tpu_custom_call.1} parent=259 // pred_check_branch
            %497 = sbr.rel target = $region354
          $region353: #{tpu_custom_call.1} parent=259 // pred_region
            // Predicated region
            $region366: #{tpu_custom_call.1} parent=353 // pred_check
              _
            $region367: #{tpu_custom_call.1} parent=353 // pred_check_branch
              %513 = sbr.rel (0) target = $region369
            $region368: #{tpu_custom_call.1} parent=353 // pred_region
              %s515 = ssub.s32 2, 1
              loop: start=0, step=1, limit=1
              $region370: #{tpu_custom_call.1} parent=368 // loop_pre_header
                _
              $region371: #{tpu_custom_call.1} parent=368 // loop_header
                %s517 = sphi 0, %s521
                %p518 = scmp.ge.s32.totalorder %s517, 1
                %s522 = sphi %s494, %s494
                %s523 = sphi %s495, %s495
              $region372: #{tpu_custom_call.1} parent=368 // loop_header_branch
                %520 = sbr.rel (%p518) target = $region376
              $region373: #{tpu_custom_call.1} parent=368 // loop_body
                %v524 = vld [vmem:[%s522] sm:%s515]
                %525 = vst [vmem:[%s523] sm:%s515] %v524
              $region374: #{tpu_custom_call.1} parent=368 // loop_footer
                %s521 = sadd.s32 1, %s517
              $region375: #{tpu_custom_call.1} parent=368 // loop_footer_branch
                %516 = sbr.rel target = $region371
              $region376: #{tpu_custom_call.1} parent=368 // loop_exit
                _
            $region369: #{tpu_custom_call.1} parent=353 // pred_fallthru
              _
          $region354: #{tpu_custom_call.1} parent=259 // pred_fallthru
            _
          // Predicated region
          $region355: #{tpu_custom_call.1} parent=259 // pred_check
            _
          $region356: #{tpu_custom_call.1} parent=259 // pred_check_branch
            %499 = sbr.rel (0) target = $region358
          $region357: #{tpu_custom_call.1} parent=259 // pred_region
            %s501 = ssub.s32 2, 1
            loop: start=0, step=1, limit=1
            $region359: #{tpu_custom_call.1} parent=357 // loop_pre_header
              _
            $region360: #{tpu_custom_call.1} parent=357 // loop_header
              %s503 = sphi 0, %s507
              %p504 = scmp.ge.s32.totalorder %s503, 1
              %s508 = sphi %s494, %s494
              %s509 = sphi %s495, %s495
            $region361: #{tpu_custom_call.1} parent=357 // loop_header_branch
              %506 = sbr.rel (%p504) target = $region365
            $region362: #{tpu_custom_call.1} parent=357 // loop_body
              %v510 = vld [vmem:[%s508] sm:%s501]
              %511 = vst [vmem:[%s509] sm:%s501] %v510
            $region363: #{tpu_custom_call.1} parent=357 // loop_footer
              %s507 = sadd.s32 1, %s503
            $region364: #{tpu_custom_call.1} parent=357 // loop_footer_branch
              %502 = sbr.rel target = $region360
            $region365: #{tpu_custom_call.1} parent=357 // loop_exit
              _
          $region358: #{tpu_custom_call.1} parent=259 // pred_fallthru
            _
          // Predicated region
          $region377: #{tpu_custom_call.1} parent=259 // pred_check
            _
          $region378: #{tpu_custom_call.1} parent=259 // pred_check_branch
            %528 = sbr.rel (0) target = $region380
          $region379: #{tpu_custom_call.1} parent=259 // pred_region
            %529 = vsyncadd %s378, 16
          $region380: #{tpu_custom_call.1} parent=259 // pred_fallthru
            _
          %s530 = sadd.s32 %s373, 4
          %s531 = sld [smem:[#allocation5 + %s530]]
          %s532 = sadd.s32 %s375, 4
          %s533 = scalar_lea.vmem %s1, %s531
          %s534 = scalar_lea.vmem [#allocation2], %s532
          // Predicated region
          $region381: #{tpu_custom_call.1} parent=259 // pred_check
            _
          $region382: #{tpu_custom_call.1} parent=259 // pred_check_branch
            %536 = sbr.rel target = $region384
          $region383: #{tpu_custom_call.1} parent=259 // pred_region
            // Predicated region
            $region396: #{tpu_custom_call.1} parent=383 // pred_check
              _
            $region397: #{tpu_custom_call.1} parent=383 // pred_check_branch
              %552 = sbr.rel (0) target = $region399
            $region398: #{tpu_custom_call.1} parent=383 // pred_region
              %s554 = ssub.s32 2, 1
              loop: start=0, step=1, limit=1
              $region400: #{tpu_custom_call.1} parent=398 // loop_pre_header
                _
              $region401: #{tpu_custom_call.1} parent=398 // loop_header
                %s556 = sphi 0, %s560
                %p557 = scmp.ge.s32.totalorder %s556, 1
                %s561 = sphi %s533, %s533
                %s562 = sphi %s534, %s534
              $region402: #{tpu_custom_call.1} parent=398 // loop_header_branch
                %559 = sbr.rel (%p557) target = $region406
              $region403: #{tpu_custom_call.1} parent=398 // loop_body
                %v563 = vld [vmem:[%s561] sm:%s554]
                %564 = vst [vmem:[%s562] sm:%s554] %v563
              $region404: #{tpu_custom_call.1} parent=398 // loop_footer
                %s560 = sadd.s32 1, %s556
              $region405: #{tpu_custom_call.1} parent=398 // loop_footer_branch
                %555 = sbr.rel target = $region401
              $region406: #{tpu_custom_call.1} parent=398 // loop_exit
                _
            $region399: #{tpu_custom_call.1} parent=383 // pred_fallthru
              _
          $region384: #{tpu_custom_call.1} parent=259 // pred_fallthru
            _
          // Predicated region
          $region385: #{tpu_custom_call.1} parent=259 // pred_check
            _
          $region386: #{tpu_custom_call.1} parent=259 // pred_check_branch
            %538 = sbr.rel (0) target = $region388
          $region387: #{tpu_custom_call.1} parent=259 // pred_region
            %s540 = ssub.s32 2, 1
            loop: start=0, step=1, limit=1
            $region389: #{tpu_custom_call.1} parent=387 // loop_pre_header
              _
            $region390: #{tpu_custom_call.1} parent=387 // loop_header
              %s542 = sphi 0, %s546
              %p543 = scmp.ge.s32.totalorder %s542, 1
              %s547 = sphi %s533, %s533
              %s548 = sphi %s534, %s534
            $region391: #{tpu_custom_call.1} parent=387 // loop_header_branch
              %545 = sbr.rel (%p543) target = $region395
            $region392: #{tpu_custom_call.1} parent=387 // loop_body
              %v549 = vld [vmem:[%s547] sm:%s540]
              %550 = vst [vmem:[%s548] sm:%s540] %v549
            $region393: #{tpu_custom_call.1} parent=387 // loop_footer
              %s546 = sadd.s32 1, %s542
            $region394: #{tpu_custom_call.1} parent=387 // loop_footer_branch
              %541 = sbr.rel target = $region390
            $region395: #{tpu_custom_call.1} parent=387 // loop_exit
              _
          $region388: #{tpu_custom_call.1} parent=259 // pred_fallthru
            _
          // Predicated region
          $region407: #{tpu_custom_call.1} parent=259 // pred_check
            _
          $region408: #{tpu_custom_call.1} parent=259 // pred_check_branch
            %567 = sbr.rel (0) target = $region410
          $region409: #{tpu_custom_call.1} parent=259 // pred_region
            %568 = vsyncadd %s378, 16
          $region410: #{tpu_custom_call.1} parent=259 // pred_fallthru
            _
          %s569 = sadd.s32 %s373, 5
          %s570 = sld [smem:[#allocation5 + %s569]]
          %s571 = sadd.s32 %s375, 5
          %s572 = scalar_lea.vmem %s1, %s570
          %s573 = scalar_lea.vmem [#allocation2], %s571
          // Predicated region
          $region411: #{tpu_custom_call.1} parent=259 // pred_check
            _
          $region412: #{tpu_custom_call.1} parent=259 // pred_check_branch
            %575 = sbr.rel target = $region414
          $region413: #{tpu_custom_call.1} parent=259 // pred_region
            // Predicated region
            $region426: #{tpu_custom_call.1} parent=413 // pred_check
              _
            $region427: #{tpu_custom_call.1} parent=413 // pred_check_branch
              %591 = sbr.rel (0) target = $region429
            $region428: #{tpu_custom_call.1} parent=413 // pred_region
              %s593 = ssub.s32 2, 1
              loop: start=0, step=1, limit=1
              $region430: #{tpu_custom_call.1} parent=428 // loop_pre_header
                _
              $region431: #{tpu_custom_call.1} parent=428 // loop_header
                %s595 = sphi 0, %s599
                %p596 = scmp.ge.s32.totalorder %s595, 1
                %s600 = sphi %s572, %s572
                %s601 = sphi %s573, %s573
              $region432: #{tpu_custom_call.1} parent=428 // loop_header_branch
                %598 = sbr.rel (%p596) target = $region436
              $region433: #{tpu_custom_call.1} parent=428 // loop_body
                %v602 = vld [vmem:[%s600] sm:%s593]
                %603 = vst [vmem:[%s601] sm:%s593] %v602
              $region434: #{tpu_custom_call.1} parent=428 // loop_footer
                %s599 = sadd.s32 1, %s595
              $region435: #{tpu_custom_call.1} parent=428 // loop_footer_branch
                %594 = sbr.rel target = $region431
              $region436: #{tpu_custom_call.1} parent=428 // loop_exit
                _
            $region429: #{tpu_custom_call.1} parent=413 // pred_fallthru
              _
          $region414: #{tpu_custom_call.1} parent=259 // pred_fallthru
            _
          // Predicated region
          $region415: #{tpu_custom_call.1} parent=259 // pred_check
            _
          $region416: #{tpu_custom_call.1} parent=259 // pred_check_branch
            %577 = sbr.rel (0) target = $region418
          $region417: #{tpu_custom_call.1} parent=259 // pred_region
            %s579 = ssub.s32 2, 1
            loop: start=0, step=1, limit=1
            $region419: #{tpu_custom_call.1} parent=417 // loop_pre_header
              _
            $region420: #{tpu_custom_call.1} parent=417 // loop_header
              %s581 = sphi 0, %s585
              %p582 = scmp.ge.s32.totalorder %s581, 1
              %s586 = sphi %s572, %s572
              %s587 = sphi %s573, %s573
            $region421: #{tpu_custom_call.1} parent=417 // loop_header_branch
              %584 = sbr.rel (%p582) target = $region425
            $region422: #{tpu_custom_call.1} parent=417 // loop_body
              %v588 = vld [vmem:[%s586] sm:%s579]
              %589 = vst [vmem:[%s587] sm:%s579] %v588
            $region423: #{tpu_custom_call.1} parent=417 // loop_footer
              %s585 = sadd.s32 1, %s581
            $region424: #{tpu_custom_call.1} parent=417 // loop_footer_branch
              %580 = sbr.rel target = $region420
            $region425: #{tpu_custom_call.1} parent=417 // loop_exit
              _
          $region418: #{tpu_custom_call.1} parent=259 // pred_fallthru
            _
          // Predicated region
          $region437: #{tpu_custom_call.1} parent=259 // pred_check
            _
          $region438: #{tpu_custom_call.1} parent=259 // pred_check_branch
            %606 = sbr.rel (0) target = $region440
          $region439: #{tpu_custom_call.1} parent=259 // pred_region
            %607 = vsyncadd %s378, 16
          $region440: #{tpu_custom_call.1} parent=259 // pred_fallthru
            _
          %s608 = sadd.s32 %s373, 6
          %s609 = sld [smem:[#allocation5 + %s608]]
          %s610 = sadd.s32 %s375, 6
          %s611 = scalar_lea.vmem %s1, %s609
          %s612 = scalar_lea.vmem [#allocation2], %s610
          // Predicated region
          $region441: #{tpu_custom_call.1} parent=259 // pred_check
            _
          $region442: #{tpu_custom_call.1} parent=259 // pred_check_branch
            %614 = sbr.rel target = $region444
          $region443: #{tpu_custom_call.1} parent=259 // pred_region
            // Predicated region
            $region456: #{tpu_custom_call.1} parent=443 // pred_check
              _
            $region457: #{tpu_custom_call.1} parent=443 // pred_check_branch
              %630 = sbr.rel (0) target = $region459
            $region458: #{tpu_custom_call.1} parent=443 // pred_region
              %s632 = ssub.s32 2, 1
              loop: start=0, step=1, limit=1
              $region460: #{tpu_custom_call.1} parent=458 // loop_pre_header
                _
              $region461: #{tpu_custom_call.1} parent=458 // loop_header
                %s634 = sphi 0, %s638
                %p635 = scmp.ge.s32.totalorder %s634, 1
                %s639 = sphi %s611, %s611
                %s640 = sphi %s612, %s612
              $region462: #{tpu_custom_call.1} parent=458 // loop_header_branch
                %637 = sbr.rel (%p635) target = $region466
              $region463: #{tpu_custom_call.1} parent=458 // loop_body
                %v641 = vld [vmem:[%s639] sm:%s632]
                %642 = vst [vmem:[%s640] sm:%s632] %v641
              $region464: #{tpu_custom_call.1} parent=458 // loop_footer
                %s638 = sadd.s32 1, %s634
              $region465: #{tpu_custom_call.1} parent=458 // loop_footer_branch
                %633 = sbr.rel target = $region461
              $region466: #{tpu_custom_call.1} parent=458 // loop_exit
                _
            $region459: #{tpu_custom_call.1} parent=443 // pred_fallthru
              _
          $region444: #{tpu_custom_call.1} parent=259 // pred_fallthru
            _
          // Predicated region
          $region445: #{tpu_custom_call.1} parent=259 // pred_check
            _
          $region446: #{tpu_custom_call.1} parent=259 // pred_check_branch
            %616 = sbr.rel (0) target = $region448
          $region447: #{tpu_custom_call.1} parent=259 // pred_region
            %s618 = ssub.s32 2, 1
            loop: start=0, step=1, limit=1
            $region449: #{tpu_custom_call.1} parent=447 // loop_pre_header
              _
            $region450: #{tpu_custom_call.1} parent=447 // loop_header
              %s620 = sphi 0, %s624
              %p621 = scmp.ge.s32.totalorder %s620, 1
              %s625 = sphi %s611, %s611
              %s626 = sphi %s612, %s612
            $region451: #{tpu_custom_call.1} parent=447 // loop_header_branch
              %623 = sbr.rel (%p621) target = $region455
            $region452: #{tpu_custom_call.1} parent=447 // loop_body
              %v627 = vld [vmem:[%s625] sm:%s618]
              %628 = vst [vmem:[%s626] sm:%s618] %v627
            $region453: #{tpu_custom_call.1} parent=447 // loop_footer
              %s624 = sadd.s32 1, %s620
            $region454: #{tpu_custom_call.1} parent=447 // loop_footer_branch
              %619 = sbr.rel target = $region450
            $region455: #{tpu_custom_call.1} parent=447 // loop_exit
              _
          $region448: #{tpu_custom_call.1} parent=259 // pred_fallthru
            _
          // Predicated region
          $region467: #{tpu_custom_call.1} parent=259 // pred_check
            _
          $region468: #{tpu_custom_call.1} parent=259 // pred_check_branch
            %645 = sbr.rel (0) target = $region470
          $region469: #{tpu_custom_call.1} parent=259 // pred_region
            %646 = vsyncadd %s378, 16
          $region470: #{tpu_custom_call.1} parent=259 // pred_fallthru
            _
          %s647 = sadd.s32 %s373, 7
          %s648 = sld [smem:[#allocation5 + %s647]]
          %s649 = sadd.s32 %s375, 7
          %s650 = scalar_lea.vmem %s1, %s648
          %s651 = scalar_lea.vmem [#allocation2], %s649
          // Predicated region
          $region471: #{tpu_custom_call.1} parent=259 // pred_check
            _
          $region472: #{tpu_custom_call.1} parent=259 // pred_check_branch
            %653 = sbr.rel target = $region474
          $region473: #{tpu_custom_call.1} parent=259 // pred_region
            // Predicated region
            $region486: #{tpu_custom_call.1} parent=473 // pred_check
              _
            $region487: #{tpu_custom_call.1} parent=473 // pred_check_branch
              %669 = sbr.rel (0) target = $region489
            $region488: #{tpu_custom_call.1} parent=473 // pred_region
              %s671 = ssub.s32 2, 1
              loop: start=0, step=1, limit=1
              $region490: #{tpu_custom_call.1} parent=488 // loop_pre_header
                _
              $region491: #{tpu_custom_call.1} parent=488 // loop_header
                %s673 = sphi 0, %s677
                %p674 = scmp.ge.s32.totalorder %s673, 1
                %s678 = sphi %s650, %s650
                %s679 = sphi %s651, %s651
              $region492: #{tpu_custom_call.1} parent=488 // loop_header_branch
                %676 = sbr.rel (%p674) target = $region496
              $region493: #{tpu_custom_call.1} parent=488 // loop_body
                %v680 = vld [vmem:[%s678] sm:%s671]
                %681 = vst [vmem:[%s679] sm:%s671] %v680
              $region494: #{tpu_custom_call.1} parent=488 // loop_footer
                %s677 = sadd.s32 1, %s673
              $region495: #{tpu_custom_call.1} parent=488 // loop_footer_branch
                %672 = sbr.rel target = $region491
              $region496: #{tpu_custom_call.1} parent=488 // loop_exit
                _
            $region489: #{tpu_custom_call.1} parent=473 // pred_fallthru
              _
          $region474: #{tpu_custom_call.1} parent=259 // pred_fallthru
            _
          // Predicated region
          $region475: #{tpu_custom_call.1} parent=259 // pred_check
            _
          $region476: #{tpu_custom_call.1} parent=259 // pred_check_branch
            %655 = sbr.rel (0) target = $region478
          $region477: #{tpu_custom_call.1} parent=259 // pred_region
            %s657 = ssub.s32 2, 1
            loop: start=0, step=1, limit=1
            $region479: #{tpu_custom_call.1} parent=477 // loop_pre_header
              _
            $region480: #{tpu_custom_call.1} parent=477 // loop_header
              %s659 = sphi 0, %s663
              %p660 = scmp.ge.s32.totalorder %s659, 1
              %s664 = sphi %s650, %s650
              %s665 = sphi %s651, %s651
            $region481: #{tpu_custom_call.1} parent=477 // loop_header_branch
              %662 = sbr.rel (%p660) target = $region485
            $region482: #{tpu_custom_call.1} parent=477 // loop_body
              %v666 = vld [vmem:[%s664] sm:%s657]
              %667 = vst [vmem:[%s665] sm:%s657] %v666
            $region483: #{tpu_custom_call.1} parent=477 // loop_footer
              %s663 = sadd.s32 1, %s659
            $region484: #{tpu_custom_call.1} parent=477 // loop_footer_branch
              %658 = sbr.rel target = $region480
            $region485: #{tpu_custom_call.1} parent=477 // loop_exit
              _
          $region478: #{tpu_custom_call.1} parent=259 // pred_fallthru
            _
          // Predicated region
          $region497: #{tpu_custom_call.1} parent=259 // pred_check
            _
          $region498: #{tpu_custom_call.1} parent=259 // pred_check_branch
            %684 = sbr.rel (0) target = $region500
          $region499: #{tpu_custom_call.1} parent=259 // pred_region
            %685 = vsyncadd %s378, 16
          $region500: #{tpu_custom_call.1} parent=259 // pred_fallthru
            _
        $region260: #{tpu_custom_call.1} parent=11 // pred_fallthru
          _
        %s686 = smul.u32 %s67, 8
        %s687 = scalar_lea.sflag [#allocation3], %s67
        %s688 = smul.u32 1, 1
        %s689 = sshll.u32 %s688, 4
        %690 = dma.done %s687, %s689
        %s691 = sshll.u32 %s688, 4
        %692 = dma.done %s687, %s691
        %s693 = sshll.u32 %s688, 4
        %694 = dma.done %s687, %s693
        %s695 = sshll.u32 %s688, 4
        %696 = dma.done %s687, %s695
        %s697 = sshll.u32 %s688, 4
        %698 = dma.done %s687, %s697
        %s699 = sshll.u32 %s688, 4
        %700 = dma.done %s687, %s699
        %s701 = sshll.u32 %s688, 4
        %702 = dma.done %s687, %s701
        %s703 = sshll.u32 %s688, 4
        %704 = dma.done %s687, %s703
        %s705 = scalar_lea.vmem [#allocation2], %s686
        %v706 = vld [vmem:[%s705] sm:$0xff]
        %v707 = vmul.f32 %v706, 5.656854
        %vm708 = vcmask 261120
        %709 = vst.msk [vmem:[%s55] sm:$0xff] %vm708, %v707
        %s710 = sand.u32 %s28, 1
        %s711 = scalar_lea.sflag [#allocation7], %s710
        %s712 = sand.u32 %s28, 1
        %s713 = smul.addr %s712, 8
        %s714 = scalar_lea.vmem [#allocation6], %s713
        // Predicated region
        $region501: #{tpu_custom_call.1} parent=11 // pred_check
          %p715 = pneg %p34
        $region502: #{tpu_custom_call.1} parent=11 // pred_check_branch
          %717 = sbr.rel (%p715) target = $region504
        $region503: #{tpu_custom_call.1} parent=11 // pred_region
          %719 = vsyncadd %s711, 0
          %s720 = smul.addr %s19, 8
          %s721 = scalar_lea.hbm %s2, %s720
          %s723 = sshll.u32 %s714, 4
          %s724 = int_to_ptr.vmem [resolvable:$true] %s723
          %s725 = sshll.u32 %s721, 4
          %s726 = int_to_ptr.hbm [resolvable:$true] %s725
          %728 = dma.vmem_to_hbm [thread:$0]  %s724, 128, %s726, %s711
        $region504: #{tpu_custom_call.1} parent=11 // pred_fallthru
          _
      $region12: #{tpu_custom_call.1} parent=5 // pred_fallthru
        _
      %p729 = scmp.le.s32.totalorder 1, %s19
      // Predicated region
      $region505: #{tpu_custom_call.1} parent=5 // pred_check
        %p730 = pneg %p729
      $region506: #{tpu_custom_call.1} parent=5 // pred_check_branch
        %732 = sbr.rel (%p730) target = $region508
      $region507: #{tpu_custom_call.1} parent=5 // pred_region
        %s733 = ssub.s32 %s19, 1
        // Predicated region
        $region509: #{tpu_custom_call.1} parent=507 // pred_check
          %p734 = pneg %p40
        $region510: #{tpu_custom_call.1} parent=507 // pred_check_branch
          %736 = sbr.rel (%p734) target = $region512
        $region511: #{tpu_custom_call.1} parent=507 // pred_region
          %s737 = sand.u32 %s31, 1
          %s738 = scalar_lea.sflag [#allocation7], %s737
          %s739 = sand.u32 %s31, 1
          %s740 = smul.addr %s739, 8
          %s741 = scalar_lea.vmem [#allocation6], %s740
          %743 = dma.done %s738, 128
        $region512: #{tpu_custom_call.1} parent=507 // pred_fallthru
          _
      $region508: #{tpu_custom_call.1} parent=5 // pred_fallthru
        _
    $region6: #{tpu_custom_call.1} parent=1 // loop_footer
      %s23 = sadd.s32 1, %s19
    $region7: #{tpu_custom_call.1} parent=1 // loop_footer_branch
      %18 = sbr.rel target = $region3
    $region8: #{tpu_custom_call.1} parent=1 // loop_exit
      _
    %744 = vsyncpa [#allocation7], 1
    %s745 = scalar_lea.sflag [#allocation7], 1
    %746 = vsyncpa %s745, 1
  %747 = vsyncmov [#allocation3]
  %s748 = vpop.sfrf %747
  %p749 = scmp.eq.s32.totalorder %s748, 0
  %p750 = pneg %p749
  %752 = shalt.err (%p750)
  %s753 = scalar_lea.sflag [#allocation3], 1
  %754 = vsyncmov %s753
  %s755 = vpop.sfrf %754
  %p756 = scmp.eq.s32.totalorder %s755, 0
  %p757 = pneg %p756
  %759 = shalt.err (%p757)

</llo_original>
